<compile_context>
chip_gen: v7x
topology: tpu7x:2x2x1
jax: 0.10.0
libtpu: 0.0.40
codegen_flags: <defaults>
</compile_context>

<pallas_src>
import numpy as np
import jax
import jax.numpy as jnp
from jax import lax
from jax.experimental import pallas as pl
from jax.experimental.pallas import tpu as pltpu


def _round_up(x, m):
    return (x + m - 1) // m * m


# ----------------------------------------------------------------------------
# Parameter construction (deterministic, matches the shapes from __init__)
# ----------------------------------------------------------------------------
def init_params(key, H, D, K, vocab):
    keys = jax.random.split(key, 12)

    def lin(k, din, dout):
        k1, k2 = jax.random.split(k)
        w = jax.random.normal(k1, (din, dout), jnp.float32) * 0.05
        b = jax.random.normal(k2, (1, dout), jnp.float32) * 0.01
        return np.asarray(w), np.asarray(b)

    tok_emb = np.asarray(jax.random.normal(keys[0], (vocab, H), jnp.float32) * 0.05)
    dist_emb = np.asarray(jax.random.normal(keys[1], (2 * K + 1, D), jnp.float32) * 0.05)
    wp, bp = lin(keys[2], 2 * H + D, H)        # pair_project
    w_pp1, b_pp1 = lin(keys[3], H, 1)          # pred_pair_layer1
    whe, bhe = lin(keys[4], H, H)              # HAN 'emo' stand-in
    whc, bhc = lin(keys[5], H, H)              # HAN 'cau' stand-in
    whp, bhp = lin(keys[6], 2 * H + D, 2 * H)  # HAN_pair stand-in
    w_e, b_e = lin(keys[7], H, 1)              # pred_e_layer
    w_c, b_c = lin(keys[8], H, 1)              # pred_c_layer
    w3, b3 = lin(keys[9], 2 * H, H)            # pred_pair_layer3
    w_pp2, b_pp2 = lin(keys[10], H, 1)         # pred_pair_layer2
    return dict(tok_emb=tok_emb, dist_emb=dist_emb, wp=wp, bp=bp,
                w_pp1=w_pp1, b_pp1=b_pp1, whe=whe, bhe=bhe, whc=whc, bhc=bhc,
                whp=whp, bhp=bhp, w_e=w_e, b_e=b_e, w_c=w_c, b_c=b_c,
                w3=w3, b3=b3, w_pp2=w_pp2, b_pp2=b_pp2)


# ----------------------------------------------------------------------------
# Pack every weight / bias / embedding table into ONE bf16 slab (done once).
# Pre-splits the [se|sc|dist] concatenation weights and pre-stacks the four
# width-1 heads into lane-dense [H, 128] blocks.
# ----------------------------------------------------------------------------
def pack_weights(p, H, D, COUT=128):
    C = max(2 * H, COUT)

    # stacked pair heads: col0 = pred_pair_layer2(h), col1 = pred_pair_layer1(pair)
    wph_h = np.zeros((H, COUT), np.float32); wph_h[:, 0] = p["w_pp2"][:, 0]
    wph_p = np.zeros((H, COUT), np.float32); wph_p[:, 1] = p["w_pp1"][:, 0]
    bph = np.zeros((1, COUT), np.float32)
    bph[0, 0] = p["b_pp2"][0, 0]; bph[0, 1] = p["b_pp1"][0, 0]
    # stacked sentence heads: col0 = pred_e(emo), col1 = pred_c(cau)
    wse = np.zeros((H, COUT), np.float32); wse[:, 0] = p["w_e"][:, 0]
    wsc = np.zeros((H, COUT), np.float32); wsc[:, 1] = p["w_c"][:, 0]
    bse = np.zeros((1, COUT), np.float32)
    bse[0, 0] = p["b_e"][0, 0]; bse[0, 1] = p["b_c"][0, 0]

    wp, whp = p["wp"], p["whp"]
    blocks = [
        ("tok_emb", p["tok_emb"]), ("dist_emb", p["dist_emb"]),
        ("wpe", wp[:H]), ("wpc", wp[H:2 * H]), ("wpd", wp[2 * H:]), ("bp", p["bp"]),
        ("whe", p["whe"]), ("bhe", p["bhe"]), ("whc", p["whc"]), ("bhc", p["bhc"]),
        ("whpe", whp[:H]), ("whpc", whp[H:2 * H]), ("whpd", whp[2 * H:]), ("bhp", p["bhp"]),
        ("w3", p["w3"]), ("b3", p["b3"]),
        ("wph_h", wph_h), ("wph_p", wph_p), ("bph", bph),
        ("wse", wse), ("wsc", wsc), ("bse", bse),
    ]
    offsets, rows, r = {}, [], 0
    for name, arr in blocks:
        arr = np.asarray(arr, np.float32)
        nr = _round_up(arr.shape[0], 8)          # 8-sublane aligned sub-blocks
        pad = np.zeros((nr, C), np.float32)
        pad[:arr.shape[0], :arr.shape[1]] = arr
        offsets[name] = r
        rows.append(pad)
        r += nr
    slab = np.concatenate(rows, axis=0)
    return jnp.asarray(slab, dtype=jnp.bfloat16), offsets, slab.shape[0], C


# ----------------------------------------------------------------------------
# Host-side index precompute (once per document structure): tiny int32 meta
# table.  col0/col1: clause token range (global, exclusive) for mean pooling;
# col2/col3: global emo/cau clause index per pair; col4: distance tag.
# ----------------------------------------------------------------------------
def build_meta(doc_len, bert_clause_b, bert_clause_sep_b, emo_pos, cau_pos, K, T):
    B = len(doc_len)
    lo, hi = [], []
    for i in range(B):
        for j in range(doc_len[i]):
            lo.append(i * T + int(bert_clause_b[i][j]))
            hi.append(i * T + int(bert_clause_sep_b[i][j]))
    S = len(lo)
    doc_off = np.concatenate([[0], np.cumsum(np.asarray(doc_len, np.int64))])[:-1]
    g_emo = np.concatenate([doc_off[i] + np.asarray(emo_pos[i]) for i in range(B)]).astype(np.int32)
    g_cau = np.concatenate([doc_off[i] + np.asarray(cau_pos[i]) for i in range(B)]).astype(np.int32)
    # NOTE: only valid for |emo - cau| <= K (same implicit assumption as the
    # reference); out-of-range tags select an all-zero distance row here.
    pos_tag = np.concatenate([K + np.asarray(emo_pos[i]) - np.asarray(cau_pos[i])
                              for i in range(B)]).astype(np.int32)
    P = g_emo.shape[0]
    S_pad = _round_up(max(S, 8), 8)
    P_pad = _round_up(max(P, 8), 8)
    R_meta = max(S_pad, P_pad)
    meta = np.zeros((R_meta, 8), np.int32)
    meta[:S, 0] = lo
    meta[:S, 1] = hi                 # padded clause rows: lo=hi=0 -> empty mask
    meta[:, 2] = -1
    meta[:, 3] = -1                  # padded pair rows: one-hot all zero
    meta[:P, 2] = g_emo
    meta[:P, 3] = g_cau
    meta[:P, 4] = pos_tag
    return meta, S, P, S_pad, P_pad, R_meta


# ----------------------------------------------------------------------------
# Fused forward kernel: embedding gather + pooling + full head, one pallas_call.
# ----------------------------------------------------------------------------
def build_fused_forward(dims, offsets):
    H, D, V = dims["H"], dims["D"], dims["V"]
    BT, NDIST = dims["BT"], dims["NDIST"]
    S_pad, P_pad = dims["S_pad"], dims["P_pad"]
    R_meta, R_slab, C, COUT = dims["R_meta"], dims["R_slab"], dims["C"], dims["COUT"]
    o = offsets
    f32, bf16 = jnp.float32, jnp.bfloat16

    def kernel(meta_ref, tok_ref, w_ref, out_pair_ref, out_sent_ref):
        def wblk(name, rows, cols):          # static slab slice (free)
            return w_ref[pl.ds(o[name], rows), pl.ds(0, cols)]

        def bias(name, cols):                # biases live in row 0 of their block
            return w_ref[pl.ds(o[name], 1), pl.ds(0, cols)].astype(f32)

        def dot(a, b):                       # bf16 MXU, f32 accumulation
            return jnp.dot(a, b, preferred_element_type=f32)

        def onehot(cond):
            return jnp.where(cond, 1.0, 0.0).astype(bf16)

        # --- token-embedding stand-in gather (one-hot matmul, stays in VMEM) ---
        tok = tok_ref[...]                                            # [BT, 1] i32
        tok_oh = onehot(tok == lax.broadcasted_iota(jnp.int32, (BT, V), 1))
        hidden = dot(tok_oh, wblk("tok_emb", V, H)).astype(bf16)      # [BT, H]

        # --- clause mean pooling over tokens strictly inside (cls, sep) --------
        lo = meta_ref[pl.ds(0, S_pad), pl.ds(0, 1)]                   # [S_pad, 1]
        hi = meta_ref[pl.ds(0, S_pad), pl.ds(1, 1)]
        t_lin = lax.broadcasted_iota(jnp.int32, (S_pad, BT), 1)
        mask = onehot((t_lin > lo) & (t_lin < hi))                    # [S_pad, BT]
        # NOTE: count clamp turns empty clauses into zero vectors instead of NaN.
        cnt = jnp.maximum(hi - lo - 1, 1).astype(f32)                 # [S_pad, 1]
        sentence = dot(mask, hidden) / cnt                            # [S_pad, H] f32
        sentence_b = sentence.astype(bf16)

        # --- emo/cau clause selection + distance embedding (one-hot matmuls) ---
        g_emo = meta_ref[pl.ds(0, P_pad), pl.ds(2, 1)]                # [P_pad, 1]
        g_cau = meta_ref[pl.ds(0, P_pad), pl.ds(3, 1)]
        pos_t = meta_ref[pl.ds(0, P_pad), pl.ds(4, 1)]
        s_row = lax.broadcasted_iota(jnp.int32, (P_pad, S_pad), 1)
        ge = onehot(g_emo == s_row)                                   # [P_pad, S_pad]
        gc = onehot(g_cau == s_row)
        d_row = lax.broadcasted_iota(jnp.int32, (P_pad, NDIST), 1)
        dist = dot(onehot(pos_t == d_row),
                   wblk("dist_emb", NDIST, D)).astype(bf16)           # [P_pad, D]

        se = dot(ge, sentence_b).astype(bf16)                         # [P_pad, H]
        sc = dot(gc, sentence_b).astype(bf16)

        # pair = pair_project([se ; sc ; dist])  (pre-split weights, no concat)
        pair = (dot(se, wblk("wpe", H, H)) + dot(sc, wblk("wpc", H, H))
                + dot(dist, wblk("wpd", D, H)) + bias("bp", H))       # [P_pad, H] f32

        # HAN stand-in: per-node-type linear projections
        emo = dot(sentence_b, wblk("whe", H, H)) + bias("bhe", H)     # [S_pad, H] f32
        cau = dot(sentence_b, wblk("whc", H, H)) + bias("bhc", H)

        emo_g = dot(ge, emo.astype(bf16)).astype(bf16)                # [P_pad, H]
        cau_g = dot(gc, cau.astype(bf16)).astype(bf16)

        # HAN_pair stand-in on [emo_g ; cau_g ; dist]   (pre-split weights)
        pair2 = (dot(emo_g, wblk("whpe", H, 2 * H))
                 + dot(cau_g, wblk("whpc", H, 2 * H))
                 + dot(dist, wblk("whpd", D, 2 * H))
                 + bias("bhp", 2 * H))                                # [P_pad, 2H] f32

        # pred_pair_layer2(ReLU(pred_pair_layer3(pair2)))
        h = jnp.maximum(dot(pair2.astype(bf16), wblk("w3", 2 * H, H))
                        + bias("b3", H), 0.0)                         # [P_pad, H] f32

        # stacked, lane-dense heads: two unmasked [*, 128] stores
        out_pair_ref[...] = (dot(h.astype(bf16), wblk("wph_h", H, COUT))
                             + dot(pair.astype(bf16), wblk("wph_p", H, COUT))
                             + bias("bph", COUT))                     # [P_pad, 128]
        out_sent_ref[...] = (dot(emo.astype(bf16), wblk("wse", H, COUT))
                             + dot(cau.astype(bf16), wblk("wsc", H, COUT))
                             + bias("bse", COUT))                     # [S_pad, 128]

    def call(meta, tok2d, slab):
        return pl.pallas_call(
            kernel,
            grid=(1,),
            out_shape=(jax.ShapeDtypeStruct((P_pad, COUT), jnp.float32),
                       jax.ShapeDtypeStruct((S_pad, COUT), jnp.float32)),
            in_specs=[pl.BlockSpec((R_meta, 8), lambda i: (0, 0)),
                      pl.BlockSpec((BT, 1), lambda i: (0, 0)),
                      pl.BlockSpec((R_slab, C), lambda i: (0, 0))],
            out_specs=(pl.BlockSpec((P_pad, COUT), lambda i: (0, 0)),
                       pl.BlockSpec((S_pad, COUT), lambda i: (0, 0))),
            compiler_params=pltpu.CompilerParams(
                dimension_semantics=("arbitrary",),
                vmem_limit_bytes=32 * 1024 * 1024),
        )(meta, tok2d, slab)

    return call


# ----------------------------------------------------------------------------
# Network-level wrapper (single jit around the single pallas_call)
# ----------------------------------------------------------------------------
def make_network_forward(dims, offsets):
    fused_call = build_fused_forward(dims, offsets)
    P, S = dims["P"], dims["S"]

    @jax.jit
    def device_fwd(meta, tok_ids, slab):
        tok2d = tok_ids.reshape(-1, 1).astype(jnp.int32)
        out_pair, out_sent = fused_call(meta, tok2d, slab)
        return out_pair[:P, 0], out_pair[:P, 1], out_sent[:S, 0], out_sent[:S, 1]

    def forward(meta, slab, bert_token_b, emo_pos, cau_pos):
        cp, cp2, pe, pc = device_fwd(jnp.asarray(meta),
                                     jnp.asarray(bert_token_b), slab)
        # emo_cau_pos bookkeeping (pure Python, same as reference)
        emo_cau_pos = [
            [[int(e) + 1, int(c) + 1] for e, c in zip(emo_pos[i], cau_pos[i])]
            for i in range(len(emo_pos))
        ]
        return cp, cp2, emo_cau_pos, pe, pc

    return forward


# ----------------------------------------------------------------------------
if __name__ == "__main__":
    # small config: configs.feat_dim=32, configs.dis_emb_dim=16, configs.K=3
    FEAT_DIM, DIS_DIM, K, VOCAB = 32, 16, 3, 50
    B, T = 2, 16
    doc_len = [3, 2]

    key = jax.random.PRNGKey(0)
    k_param, k_tok = jax.random.split(key)
    raw = init_params(k_param, FEAT_DIM, DIS_DIM, K, VOCAB)
    slab, offsets, R_slab, C = pack_weights(raw, FEAT_DIM, DIS_DIM)

    bert_token_b = jax.random.randint(k_tok, (B, T), 0, VOCAB, dtype=jnp.int32)
    # clause [CLS]/[SEP] positions per document (padded with zeros past doc_len)
    bert_clause_b = np.array([[0, 5, 10], [0, 6, 0]], np.int32)
    bert_clause_sep_b = np.array([[4, 9, 14], [5, 12, 0]], np.int32)

    # all emotion-cause candidate pairs within window K
    emo_pos = [[0, 0, 0, 1, 1, 1, 2, 2, 2], [0, 0, 1, 1]]
    cau_pos = [[0, 1, 2, 0, 1, 2, 0, 1, 2], [0, 1, 0, 1]]

    meta, S, P, S_pad, P_pad, R_meta = build_meta(
        doc_len, bert_clause_b, bert_clause_sep_b, emo_pos, cau_pos, K, T)

    dims = dict(H=FEAT_DIM, D=DIS_DIM, V=VOCAB, BT=B * T, NDIST=2 * K + 1,
                S=S, P=P, S_pad=S_pad, P_pad=P_pad, R_meta=R_meta,
                R_slab=R_slab, C=C, COUT=128)

    forward = make_network_forward(dims, offsets)
    out = forward(meta, slab, bert_token_b, emo_pos, cau_pos)
    couples_pred, couples_pred2, emo_cau_pos, pred_e, pred_c = out
    jax.block_until_ready((couples_pred, couples_pred2, pred_e, pred_c))

    assert couples_pred.shape == (P,)
    assert couples_pred2.shape == (P,)
    assert pred_e.shape == (S,)
    assert pred_c.shape == (S,)
    assert len(emo_cau_pos) == B and len(emo_cau_pos[0]) == len(emo_pos[0])
    assert bool(jnp.all(jnp.isfinite(couples_pred)))
    assert bool(jnp.all(jnp.isfinite(couples_pred2)))
    assert bool(jnp.all(jnp.isfinite(pred_e)))
    assert bool(jnp.all(jnp.isfinite(pred_c)))

    print("KERNEL_OK")
</pallas_src>

<mosaic_0001>
module attributes {stable_mosaic.version = 11 : i64} {
  func.func @kernel(%arg0: i32, %arg1: memref<16x8xi32, #tpu.memory_space<vmem>>, %arg2: memref<32x1xi32, #tpu.memory_space<vmem>>, %arg3: memref<536x128xbf16, #tpu.memory_space<vmem>>, %arg4: memref<16x128xf32, #tpu.memory_space<vmem>>, %arg5: memref<8x128xf32, #tpu.memory_space<vmem>>) attributes {dimension_semantics = [#tpu.dimension_semantics<arbitrary>], iteration_bounds = array<i64: 1>, scalar_prefetch = 0 : i64, scratch_operands = 0 : i64, tpu.core_type = #tpu.core_type<tc>, window_params = [{pipeline_mode = #tpu.pipeline_mode<synchronous>, transform_indices = @transform_0, window_bounds = array<i64: 16, 8>}, {pipeline_mode = #tpu.pipeline_mode<synchronous>, transform_indices = @transform_1, window_bounds = array<i64: 32, 1>}, {pipeline_mode = #tpu.pipeline_mode<synchronous>, transform_indices = @transform_2, window_bounds = array<i64: 536, 128>}, {pipeline_mode = #tpu.pipeline_mode<synchronous>, transform_indices = @transform_3, window_bounds = array<i64: 16, 128>}, {pipeline_mode = #tpu.pipeline_mode<synchronous>, transform_indices = @transform_4, window_bounds = array<i64: 8, 128>}]} {
    %c0 = arith.constant 0 : index
    %c0_0 = arith.constant 0 : index
    %0 = vector.load %arg2[%c0, %c0_0] : memref<32x1xi32, #tpu.memory_space<vmem>>, vector<32x1xi32>
    %1 = tpu.iota {dimensions = array<i32: 1>} : vector<32x50xi32>
    %2 = vector.broadcast %0 : vector<32x1xi32> to vector<32x50xi32>
    %3 = arith.cmpi eq, %2, %1 : vector<32x50xi32>
    %cst = arith.constant 1.000000e+00 : f32
    %cst_1 = arith.constant 0.000000e+00 : f32
    %4 = vector.broadcast %cst : f32 to vector<32x50xf32>
    %5 = vector.broadcast %cst_1 : f32 to vector<32x50xf32>
    %6 = arith.select %3, %4, %5 : vector<32x50xi1>, vector<32x50xf32>
    %7 = arith.truncf %6 : vector<32x50xf32> to vector<32x50xbf16>
    %c0_2 = arith.constant 0 : index
    %c0_3 = arith.constant 0 : index
    %8 = vector.load %arg3[%c0_2, %c0_3] : memref<536x128xbf16, #tpu.memory_space<vmem>>, vector<50x32xbf16>
    %cst_4 = arith.constant dense<0.000000e+00> : vector<32x32xf32>
    %9 = tpu.matmul %7, %8, %cst_4 {dimension_numbers = #tpu.dot_dimension_numbers<[1], [0], [0], [1], [0, 0, 1, 1], [], []>} : vector<32x50xbf16>, vector<50x32xbf16>, vector<32x32xf32> -> vector<32x32xf32>
    %10 = arith.truncf %9 : vector<32x32xf32> to vector<32x32xbf16>
    %c0_5 = arith.constant 0 : index
    %c0_6 = arith.constant 0 : index
    %11 = vector.load %arg1[%c0_5, %c0_6] : memref<16x8xi32, #tpu.memory_space<vmem>>, vector<8x1xi32>
    %c0_7 = arith.constant 0 : index
    %c1 = arith.constant 1 : index
    %12 = vector.load %arg1[%c0_7, %c1] : memref<16x8xi32, #tpu.memory_space<vmem>>, vector<8x1xi32>
    %13 = tpu.iota {dimensions = array<i32: 1>} : vector<8x32xi32>
    %14 = vector.broadcast %11 : vector<8x1xi32> to vector<8x32xi32>
    %15 = arith.cmpi sgt, %13, %14 : vector<8x32xi32>
    %16 = vector.broadcast %12 : vector<8x1xi32> to vector<8x32xi32>
    %17 = arith.cmpi slt, %13, %16 : vector<8x32xi32>
    %18 = arith.andi %15, %17 : vector<8x32xi1>
    %cst_8 = arith.constant 1.000000e+00 : f32
    %cst_9 = arith.constant 0.000000e+00 : f32
    %19 = vector.broadcast %cst_8 : f32 to vector<8x32xf32>
    %20 = vector.broadcast %cst_9 : f32 to vector<8x32xf32>
    %21 = arith.select %18, %19, %20 : vector<8x32xi1>, vector<8x32xf32>
    %22 = arith.truncf %21 : vector<8x32xf32> to vector<8x32xbf16>
    %23 = arith.subi %12, %11 : vector<8x1xi32>
    %c1_i32 = arith.constant 1 : i32
    %24 = vector.broadcast %c1_i32 : i32 to vector<8x1xi32>
    %25 = arith.subi %23, %24 : vector<8x1xi32>
    %c1_i32_10 = arith.constant 1 : i32
    %26 = vector.broadcast %c1_i32_10 : i32 to vector<8x1xi32>
    %27 = arith.maxsi %25, %26 : vector<8x1xi32>
    %28 = arith.sitofp %27 : vector<8x1xi32> to vector<8x1xf32>
    %cst_11 = arith.constant dense<0.000000e+00> : vector<8x32xf32>
    %29 = tpu.matmul %22, %10, %cst_11 {dimension_numbers = #tpu.dot_dimension_numbers<[1], [0], [0], [1], [0, 0, 1, 1], [], []>} : vector<8x32xbf16>, vector<32x32xbf16>, vector<8x32xf32> -> vector<8x32xf32>
    %30 = vector.broadcast %28 : vector<8x1xf32> to vector<8x32xf32>
    %31 = arith.divf %29, %30 : vector<8x32xf32>
    %32 = arith.truncf %31 : vector<8x32xf32> to vector<8x32xbf16>
    %c0_12 = arith.constant 0 : index
    %c2 = arith.constant 2 : index
    %33 = vector.load %arg1[%c0_12, %c2] : memref<16x8xi32, #tpu.memory_space<vmem>>, vector<16x1xi32>
    %c0_13 = arith.constant 0 : index
    %c3 = arith.constant 3 : index
    %34 = vector.load %arg1[%c0_13, %c3] : memref<16x8xi32, #tpu.memory_space<vmem>>, vector<16x1xi32>
    %c0_14 = arith.constant 0 : index
    %c4 = arith.constant 4 : index
    %35 = vector.load %arg1[%c0_14, %c4] : memref<16x8xi32, #tpu.memory_space<vmem>>, vector<16x1xi32>
    %36 = tpu.iota {dimensions = array<i32: 1>} : vector<16x8xi32>
    %37 = vector.broadcast %33 : vector<16x1xi32> to vector<16x8xi32>
    %38 = arith.cmpi eq, %37, %36 : vector<16x8xi32>
    %cst_15 = arith.constant 1.000000e+00 : f32
    %cst_16 = arith.constant 0.000000e+00 : f32
    %39 = vector.broadcast %cst_15 : f32 to vector<16x8xf32>
    %40 = vector.broadcast %cst_16 : f32 to vector<16x8xf32>
    %41 = arith.select %38, %39, %40 : vector<16x8xi1>, vector<16x8xf32>
    %42 = arith.truncf %41 : vector<16x8xf32> to vector<16x8xbf16>
    %43 = vector.broadcast %34 : vector<16x1xi32> to vector<16x8xi32>
    %44 = arith.cmpi eq, %43, %36 : vector<16x8xi32>
    %cst_17 = arith.constant 1.000000e+00 : f32
    %cst_18 = arith.constant 0.000000e+00 : f32
    %45 = vector.broadcast %cst_17 : f32 to vector<16x8xf32>
    %46 = vector.broadcast %cst_18 : f32 to vector<16x8xf32>
    %47 = arith.select %44, %45, %46 : vector<16x8xi1>, vector<16x8xf32>
    %48 = arith.truncf %47 : vector<16x8xf32> to vector<16x8xbf16>
    %49 = tpu.iota {dimensions = array<i32: 1>} : vector<16x7xi32>
    %50 = vector.broadcast %35 : vector<16x1xi32> to vector<16x7xi32>
    %51 = arith.cmpi eq, %50, %49 : vector<16x7xi32>
    %cst_19 = arith.constant 1.000000e+00 : f32
    %cst_20 = arith.constant 0.000000e+00 : f32
    %52 = vector.broadcast %cst_19 : f32 to vector<16x7xf32>
    %53 = vector.broadcast %cst_20 : f32 to vector<16x7xf32>
    %54 = arith.select %51, %52, %53 : vector<16x7xi1>, vector<16x7xf32>
    %55 = arith.truncf %54 : vector<16x7xf32> to vector<16x7xbf16>
    %c56 = arith.constant 56 : index
    %c0_21 = arith.constant 0 : index
    %56 = vector.load %arg3[%c56, %c0_21] : memref<536x128xbf16, #tpu.memory_space<vmem>>, vector<7x16xbf16>
    %cst_22 = arith.constant dense<0.000000e+00> : vector<16x16xf32>
    %57 = tpu.matmul %55, %56, %cst_22 {dimension_numbers = #tpu.dot_dimension_numbers<[1], [0], [0], [1], [0, 0, 1, 1], [], []>} : vector<16x7xbf16>, vector<7x16xbf16>, vector<16x16xf32> -> vector<16x16xf32>
    %58 = arith.truncf %57 : vector<16x16xf32> to vector<16x16xbf16>
    %cst_23 = arith.constant dense<0.000000e+00> : vector<16x32xf32>
    %59 = tpu.matmul %42, %32, %cst_23 {dimension_numbers = #tpu.dot_dimension_numbers<[1], [0], [0], [1], [0, 0, 1, 1], [], []>} : vector<16x8xbf16>, vector<8x32xbf16>, vector<16x32xf32> -> vector<16x32xf32>
    %60 = arith.truncf %59 : vector<16x32xf32> to vector<16x32xbf16>
    %cst_24 = arith.constant dense<0.000000e+00> : vector<16x32xf32>
    %61 = tpu.matmul %48, %32, %cst_24 {dimension_numbers = #tpu.dot_dimension_numbers<[1], [0], [0], [1], [0, 0, 1, 1], [], []>} : vector<16x8xbf16>, vector<8x32xbf16>, vector<16x32xf32> -> vector<16x32xf32>
    %62 = arith.truncf %61 : vector<16x32xf32> to vector<16x32xbf16>
    %c64 = arith.constant 64 : index
    %c0_25 = arith.constant 0 : index
    %63 = vector.load %arg3[%c64, %c0_25] : memref<536x128xbf16, #tpu.memory_space<vmem>>, vector<32x32xbf16>
    %cst_26 = arith.constant dense<0.000000e+00> : vector<16x32xf32>
    %64 = tpu.matmul %60, %63, %cst_26 {dimension_numbers = #tpu.dot_dimension_numbers<[1], [0], [0], [1], [0, 0, 1, 1], [], []>} : vector<16x32xbf16>, vector<32x32xbf16>, vector<16x32xf32> -> vector<16x32xf32>
    %c96 = arith.constant 96 : index
    %c0_27 = arith.constant 0 : index
    %65 = vector.load %arg3[%c96, %c0_27] : memref<536x128xbf16, #tpu.memory_space<vmem>>, vector<32x32xbf16>
    %cst_28 = arith.constant dense<0.000000e+00> : vector<16x32xf32>
    %66 = tpu.matmul %62, %65, %cst_28 {dimension_numbers = #tpu.dot_dimension_numbers<[1], [0], [0], [1], [0, 0, 1, 1], [], []>} : vector<16x32xbf16>, vector<32x32xbf16>, vector<16x32xf32> -> vector<16x32xf32>
    %67 = arith.addf %64, %66 : vector<16x32xf32>
    %c128 = arith.constant 128 : index
    %c0_29 = arith.constant 0 : index
    %68 = vector.load %arg3[%c128, %c0_29] : memref<536x128xbf16, #tpu.memory_space<vmem>>, vector<16x32xbf16>
    %cst_30 = arith.constant dense<0.000000e+00> : vector<16x32xf32>
    %69 = tpu.matmul %58, %68, %cst_30 {dimension_numbers = #tpu.dot_dimension_numbers<[1], [0], [0], [1], [0, 0, 1, 1], [], []>} : vector<16x16xbf16>, vector<16x32xbf16>, vector<16x32xf32> -> vector<16x32xf32>
    %70 = arith.addf %67, %69 : vector<16x32xf32>
    %c144 = arith.constant 144 : index
    %c0_31 = arith.constant 0 : index
    %71 = vector.load %arg3[%c144, %c0_31] : memref<536x128xbf16, #tpu.memory_space<vmem>>, vector<1x32xbf16>
    %72 = arith.extf %71 : vector<1x32xbf16> to vector<1x32xf32>
    %73 = vector.broadcast %72 : vector<1x32xf32> to vector<16x32xf32>
    %74 = arith.addf %70, %73 : vector<16x32xf32>
    %c152 = arith.constant 152 : index
    %c0_32 = arith.constant 0 : index
    %75 = vector.load %arg3[%c152, %c0_32] : memref<536x128xbf16, #tpu.memory_space<vmem>>, vector<32x32xbf16>
    %cst_33 = arith.constant dense<0.000000e+00> : vector<8x32xf32>
    %76 = tpu.matmul %32, %75, %cst_33 {dimension_numbers = #tpu.dot_dimension_numbers<[1], [0], [0], [1], [0, 0, 1, 1], [], []>} : vector<8x32xbf16>, vector<32x32xbf16>, vector<8x32xf32> -> vector<8x32xf32>
    %c184 = arith.constant 184 : index
    %c0_34 = arith.constant 0 : index
    %77 = vector.load %arg3[%c184, %c0_34] : memref<536x128xbf16, #tpu.memory_space<vmem>>, vector<1x32xbf16>
    %78 = arith.extf %77 : vector<1x32xbf16> to vector<1x32xf32>
    %79 = vector.broadcast %78 : vector<1x32xf32> to vector<8x32xf32>
    %80 = arith.addf %76, %79 : vector<8x32xf32>
    %c192 = arith.constant 192 : index
    %c0_35 = arith.constant 0 : index
    %81 = vector.load %arg3[%c192, %c0_35] : memref<536x128xbf16, #tpu.memory_space<vmem>>, vector<32x32xbf16>
    %cst_36 = arith.constant dense<0.000000e+00> : vector<8x32xf32>
    %82 = tpu.matmul %32, %81, %cst_36 {dimension_numbers = #tpu.dot_dimension_numbers<[1], [0], [0], [1], [0, 0, 1, 1], [], []>} : vector<8x32xbf16>, vector<32x32xbf16>, vector<8x32xf32> -> vector<8x32xf32>
    %c224 = arith.constant 224 : index
    %c0_37 = arith.constant 0 : index
    %83 = vector.load %arg3[%c224, %c0_37] : memref<536x128xbf16, #tpu.memory_space<vmem>>, vector<1x32xbf16>
    %84 = arith.extf %83 : vector<1x32xbf16> to vector<1x32xf32>
    %85 = vector.broadcast %84 : vector<1x32xf32> to vector<8x32xf32>
    %86 = arith.addf %82, %85 : vector<8x32xf32>
    %87 = arith.truncf %80 : vector<8x32xf32> to vector<8x32xbf16>
    %cst_38 = arith.constant dense<0.000000e+00> : vector<16x32xf32>
    %88 = tpu.matmul %42, %87, %cst_38 {dimension_numbers = #tpu.dot_dimension_numbers<[1], [0], [0], [1], [0, 0, 1, 1], [], []>} : vector<16x8xbf16>, vector<8x32xbf16>, vector<16x32xf32> -> vector<16x32xf32>
    %89 = arith.truncf %88 : vector<16x32xf32> to vector<16x32xbf16>
    %90 = arith.truncf %86 : vector<8x32xf32> to vector<8x32xbf16>
    %cst_39 = arith.constant dense<0.000000e+00> : vector<16x32xf32>
    %91 = tpu.matmul %48, %90, %cst_39 {dimension_numbers = #tpu.dot_dimension_numbers<[1], [0], [0], [1], [0, 0, 1, 1], [], []>} : vector<16x8xbf16>, vector<8x32xbf16>, vector<16x32xf32> -> vector<16x32xf32>
    %92 = arith.truncf %91 : vector<16x32xf32> to vector<16x32xbf16>
    %c232 = arith.constant 232 : index
    %c0_40 = arith.constant 0 : index
    %93 = vector.load %arg3[%c232, %c0_40] : memref<536x128xbf16, #tpu.memory_space<vmem>>, vector<32x64xbf16>
    %cst_41 = arith.constant dense<0.000000e+00> : vector<16x64xf32>
    %94 = tpu.matmul %89, %93, %cst_41 {dimension_numbers = #tpu.dot_dimension_numbers<[1], [0], [0], [1], [0, 0, 1, 1], [], []>} : vector<16x32xbf16>, vector<32x64xbf16>, vector<16x64xf32> -> vector<16x64xf32>
    %c264 = arith.constant 264 : index
    %c0_42 = arith.constant 0 : index
    %95 = vector.load %arg3[%c264, %c0_42] : memref<536x128xbf16, #tpu.memory_space<vmem>>, vector<32x64xbf16>
    %cst_43 = arith.constant dense<0.000000e+00> : vector<16x64xf32>
    %96 = tpu.matmul %92, %95, %cst_43 {dimension_numbers = #tpu.dot_dimension_numbers<[1], [0], [0], [1], [0, 0, 1, 1], [], []>} : vector<16x32xbf16>, vector<32x64xbf16>, vector<16x64xf32> -> vector<16x64xf32>
    %97 = arith.addf %94, %96 : vector<16x64xf32>
    %c296 = arith.constant 296 : index
    %c0_44 = arith.constant 0 : index
    %98 = vector.load %arg3[%c296, %c0_44] : memref<536x128xbf16, #tpu.memory_space<vmem>>, vector<16x64xbf16>
    %cst_45 = arith.constant dense<0.000000e+00> : vector<16x64xf32>
    %99 = tpu.matmul %58, %98, %cst_45 {dimension_numbers = #tpu.dot_dimension_numbers<[1], [0], [0], [1], [0, 0, 1, 1], [], []>} : vector<16x16xbf16>, vector<16x64xbf16>, vector<16x64xf32> -> vector<16x64xf32>
    %100 = arith.addf %97, %99 : vector<16x64xf32>
    %c312 = arith.constant 312 : index
    %c0_46 = arith.constant 0 : index
    %101 = vector.load %arg3[%c312, %c0_46] : memref<536x128xbf16, #tpu.memory_space<vmem>>, vector<1x64xbf16>
    %102 = arith.extf %101 : vector<1x64xbf16> to vector<1x64xf32>
    %103 = vector.broadcast %102 : vector<1x64xf32> to vector<16x64xf32>
    %104 = arith.addf %100, %103 : vector<16x64xf32>
    %105 = arith.truncf %104 : vector<16x64xf32> to vector<16x64xbf16>
    %c320 = arith.constant 320 : index
    %c0_47 = arith.constant 0 : index
    %106 = vector.load %arg3[%c320, %c0_47] : memref<536x128xbf16, #tpu.memory_space<vmem>>, vector<64x32xbf16>
    %cst_48 = arith.constant dense<0.000000e+00> : vector<16x32xf32>
    %107 = tpu.matmul %105, %106, %cst_48 {dimension_numbers = #tpu.dot_dimension_numbers<[1], [0], [0], [1], [0, 0, 1, 1], [], []>} : vector<16x64xbf16>, vector<64x32xbf16>, vector<16x32xf32> -> vector<16x32xf32>
    %c384 = arith.constant 384 : index
    %c0_49 = arith.constant 0 : index
    %108 = vector.load %arg3[%c384, %c0_49] : memref<536x128xbf16, #tpu.memory_space<vmem>>, vector<1x32xbf16>
    %109 = arith.extf %108 : vector<1x32xbf16> to vector<1x32xf32>
    %110 = vector.broadcast %109 : vector<1x32xf32> to vector<16x32xf32>
    %111 = arith.addf %107, %110 : vector<16x32xf32>
    %cst_50 = arith.constant 0.000000e+00 : f32
    %112 = vector.broadcast %cst_50 : f32 to vector<16x32xf32>
    %113 = arith.maximumf %111, %112 : vector<16x32xf32>
    %114 = arith.truncf %113 : vector<16x32xf32> to vector<16x32xbf16>
    %c392 = arith.constant 392 : index
    %c0_51 = arith.constant 0 : index
    %115 = vector.load %arg3[%c392, %c0_51] : memref<536x128xbf16, #tpu.memory_space<vmem>>, vector<32x128xbf16>
    %cst_52 = arith.constant dense<0.000000e+00> : vector<16x128xf32>
    %116 = tpu.matmul %114, %115, %cst_52 {dimension_numbers = #tpu.dot_dimension_numbers<[1], [0], [0], [1], [0, 0, 1, 1], [], []>} : vector<16x32xbf16>, vector<32x128xbf16>, vector<16x128xf32> -> vector<16x128xf32>
    %117 = arith.truncf %74 : vector<16x32xf32> to vector<16x32xbf16>
    %c424 = arith.constant 424 : index
    %c0_53 = arith.constant 0 : index
    %118 = vector.load %arg3[%c424, %c0_53] : memref<536x128xbf16, #tpu.memory_space<vmem>>, vector<32x128xbf16>
    %cst_54 = arith.constant dense<0.000000e+00> : vector<16x128xf32>
    %119 = tpu.matmul %117, %118, %cst_54 {dimension_numbers = #tpu.dot_dimension_numbers<[1], [0], [0], [1], [0, 0, 1, 1], [], []>} : vector<16x32xbf16>, vector<32x128xbf16>, vector<16x128xf32> -> vector<16x128xf32>
    %120 = arith.addf %116, %119 : vector<16x128xf32>
    %c456 = arith.constant 456 : index
    %c0_55 = arith.constant 0 : index
    %121 = vector.load %arg3[%c456, %c0_55] : memref<536x128xbf16, #tpu.memory_space<vmem>>, vector<1x128xbf16>
    %122 = arith.extf %121 : vector<1x128xbf16> to vector<1x128xf32>
    %123 = vector.broadcast %122 : vector<1x128xf32> to vector<16x128xf32>
    %124 = arith.addf %120, %123 : vector<16x128xf32>
    %c0_56 = arith.constant 0 : index
    %c0_57 = arith.constant 0 : index
    %125 = vector.load %arg4[%c0_56, %c0_57] : memref<16x128xf32, #tpu.memory_space<vmem>>, vector<16x128xf32>
    tpu.vector_store %arg4[%c0_56, %c0_57], %124 {strides = array<i32>} : memref<16x128xf32, #tpu.memory_space<vmem>>, vector<16x128xf32>,
    %126 = arith.truncf %80 : vector<8x32xf32> to vector<8x32xbf16>
    %c464 = arith.constant 464 : index
    %c0_58 = arith.constant 0 : index
    %127 = vector.load %arg3[%c464, %c0_58] : memref<536x128xbf16, #tpu.memory_space<vmem>>, vector<32x128xbf16>
    %cst_59 = arith.constant dense<0.000000e+00> : vector<8x128xf32>
    %128 = tpu.matmul %126, %127, %cst_59 {dimension_numbers = #tpu.dot_dimension_numbers<[1], [0], [0], [1], [0, 0, 1, 1], [], []>} : vector<8x32xbf16>, vector<32x128xbf16>, vector<8x128xf32> -> vector<8x128xf32>
    %129 = arith.truncf %86 : vector<8x32xf32> to vector<8x32xbf16>
    %c496 = arith.constant 496 : index
    %c0_60 = arith.constant 0 : index
    %130 = vector.load %arg3[%c496, %c0_60] : memref<536x128xbf16, #tpu.memory_space<vmem>>, vector<32x128xbf16>
    %cst_61 = arith.constant dense<0.000000e+00> : vector<8x128xf32>
    %131 = tpu.matmul %129, %130, %cst_61 {dimension_numbers = #tpu.dot_dimension_numbers<[1], [0], [0], [1], [0, 0, 1, 1], [], []>} : vector<8x32xbf16>, vector<32x128xbf16>, vector<8x128xf32> -> vector<8x128xf32>
    %132 = arith.addf %128, %131 : vector<8x128xf32>
    %c528 = arith.constant 528 : index
    %c0_62 = arith.constant 0 : index
    %133 = vector.load %arg3[%c528, %c0_62] : memref<536x128xbf16, #tpu.memory_space<vmem>>, vector<1x128xbf16>
    %134 = arith.extf %133 : vector<1x128xbf16> to vector<1x128xf32>
    %135 = vector.broadcast %134 : vector<1x128xf32> to vector<8x128xf32>
    %136 = arith.addf %132, %135 : vector<8x128xf32>
    %c0_63 = arith.constant 0 : index
    %c0_64 = arith.constant 0 : index
    %137 = vector.load %arg5[%c0_63, %c0_64] : memref<8x128xf32, #tpu.memory_space<vmem>>, vector<8x128xf32>
    tpu.vector_store %arg5[%c0_63, %c0_64], %136 {strides = array<i32>} : memref<8x128xf32, #tpu.memory_space<vmem>>, vector<8x128xf32>,
    return
  }
  func.func @transform_0(%arg0: i32) -> (i32, i32) {
    %c0_i32 = arith.constant 0 : i32
    %c0_i32_0 = arith.constant 0 : i32
    %c0_i32_1 = arith.constant 0 : i32
    return %c0_i32, %c0_i32_0 : i32, i32
  }
  func.func @transform_1(%arg0: i32) -> (i32, i32) {
    %c0_i32 = arith.constant 0 : i32
    %c0_i32_0 = arith.constant 0 : i32
    %c0_i32_1 = arith.constant 0 : i32
    return %c0_i32, %c0_i32_0 : i32, i32
  }
  func.func @transform_2(%arg0: i32) -> (i32, i32) {
    %c0_i32 = arith.constant 0 : i32
    %c0_i32_0 = arith.constant 0 : i32
    %c0_i32_1 = arith.constant 0 : i32
    return %c0_i32, %c0_i32_0 : i32, i32
  }
  func.func @transform_3(%arg0: i32) -> (i32, i32) {
    %c0_i32 = arith.constant 0 : i32
    %c0_i32_0 = arith.constant 0 : i32
    %c0_i32_1 = arith.constant 0 : i32
    return %c0_i32, %c0_i32_0 : i32, i32
  }
  func.func @transform_4(%arg0: i32) -> (i32, i32) {
    %c0_i32 = arith.constant 0 : i32
    %c0_i32_0 = arith.constant 0 : i32
    %c0_i32_1 = arith.constant 0 : i32
    return %c0_i32, %c0_i32_0 : i32, i32
  }
}

</mosaic_0001>

<llo_original>
// kernel: device_fwd.1
$region0: #{device_fwd.1}
  #allocation0 [shape = 'u32[]', space=smem, size = 0x4, offset = 0x4, fixed_abs, tag = 'smem constant byte address 0x4 - core index']
  #allocation1 [shape = 'u32[144,128]{1,0:T(1,128)}', space=vmem, size = 0x12000, scoped, tag = 'internal scratch']
  %s0 = inlined_call_operand.vmem [shape: s32[16,8], index: 0, kind: input, shape index: {}]
  %s1 = inlined_call_operand.vmem [shape: s32[32,1], index: 1, kind: input, shape index: {}]
  %s2 = inlined_call_operand.hbm [shape: bf16[536,128], index: 2, kind: input, shape index: {}]
  %s3 = inlined_call_operand.vmem [shape: f32[16,128], index: 3, kind: output, shape index: {0}]
  %s4 = inlined_call_operand.vmem [shape: f32[8,128], index: 4, kind: output, shape index: {1}]
  %5 = xla_tuple %s3, %s4
  %s6 = sld [smem:[#allocation0]]
  $region34: #{device_fwd.1} parent=0
    _
  %s8 = ssub.s32 1, %s6
  %s9 = scalar_select 0, %s8, %s6
  $region1: #{device_fwd.1} parent=0
    #allocation2 [shape = 'u8[137216]{0}', space=vmem, size = 0x21800, scoped, tag = 'input window, operand 2, single buffered']
    #allocation3 [shape = 's32[1]{0}', space=sflag, size = 0x4, scoped, tag = 'scoped memory for device_fwd.1']
    %10 = vsyncpa [#allocation3], 0
    // Predicated region
    $region2: #{device_fwd.1} parent=1 // pred_check
      _
    $region3: #{device_fwd.1} parent=1 // pred_check_branch
      %12 = sbr.rel (0) target = $region5
    $region4: #{device_fwd.1} parent=1 // pred_region
      _
    $region5: #{device_fwd.1} parent=1 // pred_fallthru
      _
    // Predicated region
    $region6: #{device_fwd.1} parent=1 // pred_check
      _
    $region7: #{device_fwd.1} parent=1 // pred_check_branch
      %14 = sbr.rel (0) target = $region9
    $region8: #{device_fwd.1} parent=1 // pred_region
      _
    $region9: #{device_fwd.1} parent=1 // pred_fallthru
      _
    // Predicated region
    $region10: #{device_fwd.1} parent=1 // pred_check
      _
    $region11: #{device_fwd.1} parent=1 // pred_check_branch
      %16 = sbr.rel (0) target = $region13
    $region12: #{device_fwd.1} parent=1 // pred_region
      %s18 = ssub.s32 4288, 4288
      %19 = vsyncadd [#allocation3], %s18
      %s20 = sshll.u32 [#allocation2], 4
      %s21 = int_to_ptr.vmem [resolvable:$true] %s20
      %26 = dma.hbm_to_vmem [thread:$0]  %s2, 4288, %s21, [#allocation3], 64, 64, 4
    $region13: #{device_fwd.1} parent=1 // pred_fallthru
      _
    // Predicated region
    $region14: #{device_fwd.1} parent=1 // pred_check
      _
    $region15: #{device_fwd.1} parent=1 // pred_check_branch
      %28 = sbr.rel (0) target = $region17
    $region16: #{device_fwd.1} parent=1 // pred_region
      %29 = dma.done [#allocation3], 4288
    $region17: #{device_fwd.1} parent=1 // pred_fallthru
      _
    %v31 = vld [vmem:[%s1] sm:$0xff]
    %v32 = vld [vmem:[%s1 + $0x8] sm:$0xff]
    %v33 = vld [vmem:[%s1 + $0x10] sm:$0xff]
    %v34 = vld [vmem:[%s1 + $0x18] sm:$0xff]
    %v35 = vlaneseq
    %v36 = vand.u32 %v35, 127
    %37 = vset.pattern.permute.xlu0 0
    %38 = vperm.xlu0 %37, %v31
    %v39 = vpop.permute.xlu0 %38
    %40 = vset.pattern.permute.xlu0 0
    %41 = vperm.xlu0 %40, %v32
    %v42 = vpop.permute.xlu0 %41
    %43 = vset.pattern.permute.xlu0 0
    %44 = vperm.xlu0 %43, %v33
    %v45 = vpop.permute.xlu0 %44
    %46 = vset.pattern.permute.xlu0 0
    %47 = vperm.xlu0 %46, %v34
    %v48 = vpop.permute.xlu0 %47
    %vm49 = vcmp.eq.s32.totalorder %v39, %v36
    %vm50 = vcmp.eq.s32.totalorder %v42, %v36
    %vm51 = vcmp.eq.s32.totalorder %v45, %v36
    %vm52 = vcmp.eq.s32.totalorder %v48, %v36
    %v53 = vsel %vm49, 1.0, 0.0
    %v54 = vsel %vm50, 1.0, 0.0
    %v55 = vsel %vm51, 1.0, 0.0
    %v56 = vsel %vm52, 1.0, 0.0
    %v57 = vpack.c.bf16 %v54, %v53
    %v58 = vpack.c.bf16 %v56, %v55
    %v59 = vld [vmem:[#allocation2] sm:$0xf]
    %v60 = vld [vmem:[#allocation2 + $0x4] sm:$0xf]
    %v61 = vld [vmem:[#allocation2 + $0x8] sm:$0xf]
    %v62 = vld [vmem:[#allocation2 + $0xc] sm:$0xf]
    %v63 = vld [vmem:[#allocation2 + $0x10] sm:$0xf]
    %v64 = vld [vmem:[#allocation2 + $0x14] sm:$0xf]
    %v65 = vld [vmem:[#allocation2 + $0x18] sm:$0x1]
    %v73 = vunpack.c.l.b16 %v59
    %v74 = vunpack.c.l.b16 %v60
    %v75 = vunpack.c.l.b16 %v61
    %v76 = vunpack.c.l.b16 %v62
    %v77 = vunpack.c.l.b16 %v63
    %v78 = vunpack.c.l.b16 %v64
    %v79 = vunpack.c.l.b16 %v65
    %v80 = vpack.c.b16 %v74, %v73
    %v81 = vpack.c.b16 %v76, %v75
    %v82 = vpack.c.b16 %v78, %v77
    %v83 = vpack.c.b16 %v79, %v79
    %vm87 = vcmask 408576
    %v89 = vsel %vm87, %v57, 0
    %v92 = vsel %vm87, %v58, 0
    %vm94 = vcmask 1040384
    %v96 = vsel %vm94, %v83, 0
    %98 = vmatprep.subr.bf16.mxu0 0
    %99 = vmatpush1.bf16.msra.mxu0 %v80
    %100 = vmatprep.subr.bf16.mxu0 0
    %101 = vmatpush1.bf16.msra.mxu0 %v81
    %102 = vmatprep.subr.bf16.mxu0 0
    %103 = vmatpush1.bf16.msra.mxu0 %v82
    %104 = vmatprep.subr.bf16.mxu0 0
    %105 = vmatpush1.bf16.msra.mxu0 %v96
    %106 = vmatprep.subr.bf16.mxu0 0
    %107 = vmatpush1.bf16.msra.mxu0 0
    %108 = vmatprep.subr.bf16.mxu0 0
    %109 = vmatpush1.bf16.msra.mxu0 0
    %110 = vmatprep.subr.bf16.mxu0 0
    %111 = vmatpush1.bf16.msra.mxu0 0
    %112 = vmatprep.subr.bf16.mxu0 0
    %113 = vmatpush1.bf16.msra.mxu0 0
    %114 = vmatprep.subr.bf16.mxu0 0
    %115 = vmatpush1.bf16.msra.mxu0 0
    %116 = vmatprep.subr.bf16.mxu0 0
    %117 = vmatpush1.bf16.msra.mxu0 0
    %118 = vmatprep.subr.bf16.mxu0 0
    %119 = vmatpush1.bf16.msra.mxu0 0
    %120 = vmatprep.subr.bf16.mxu0 0
    %121 = vmatpush1.bf16.msra.mxu0 0
    %122 = vmatprep.subr.bf16.mxu0 0
    %123 = vmatpush1.bf16.msra.mxu0 0
    %124 = vmatprep.subr.bf16.mxu0 0
    %125 = vmatpush1.bf16.msra.mxu0 0
    %126 = vmatprep.subr.bf16.mxu0 0
    %127 = vmatpush1.bf16.msra.mxu0 0
    %128 = vmatprep.subr.bf16.mxu0 0
    %129 = vmatpush1.bf16.msra.mxu0 0
    %130 = vmatprep.mubr.bf16.mxu0 0
    %131 = vmatmul.mubr.bf16.gmra.mrb[0].mxu0 %v89
    %v132 = vpop.f32.mrb[0].mxu0
    %v133 = vadd.f32 0.0, %v132
    %v134 = vpop.f32.mrb[0].mxu0
    %v135 = vpop.f32.mrb[0].mxu0
    %v136 = vadd.f32 0.0, %v135
    %v137 = vpop.f32.mrb[0].mxu0
    %138 = vmatprep.mubr.bf16.mxu0 0
    %139 = vmatmul.mubr.bf16.gmra.mrb[0].mxu0 %v92
    %v140 = vpop.f32.mrb[0].mxu0
    %v141 = vadd.f32 0.0, %v140
    %v142 = vpop.f32.mrb[0].mxu0
    %v143 = vpop.f32.mrb[0].mxu0
    %v144 = vadd.f32 0.0, %v143
    %v145 = vpop.f32.mrb[0].mxu0
    %146 = vdwg.mxu0
    %v147 = vpack.c.bf16 %v136, %v133
    %v148 = vpack.c.bf16 %v144, %v141
    %v149 = vld [vmem:[%s0] sm:$0xff]
    %150 = vset.pattern.permute.xlu0 0
    %151 = vperm.xlu0 %150, %v149
    %v152 = vpop.permute.xlu0 %151
    %vm153 = vcmp.gt.s32.totalorder %v36, %v152
    %154 = vset.pattern.permute.xlu0 1
    %155 = vperm.xlu0 %154, %v149
    %v156 = vpop.permute.xlu0 %155
    %vm157 = vcmp.lt.s32.totalorder %v36, %v156
    %vm158 = vmand %vm153, %vm157
    %v159 = vsel %vm158, 1.0, 0.0
    %v160 = vpack.c.bf16 %v159, %v159
    %161 = vrot.lane.b32.xlu0 %v149, 1
    %v162 = vpop.permute.xlu0 %161
    %v163 = vsub.s32 %v149, %v162
    %v164 = vsub.s32 %v163, 1
    %vm165 = vcmp.gt.s32.totalorder %v164, 1
    %v166 = vsel %vm165, %v164, 1
    %v167 = vcvt.s32.f32 %v166
    %vm168 = vcmask 261120
    %v170 = vsel %vm168, %v160, 0
    %172 = vmatprep.subr.bf16.mxu0 0
    %173 = vmatpush1.bf16.msra.mxu0 %v147
    %174 = vmatprep.subr.bf16.mxu0 0
    %175 = vmatpush1.bf16.msra.mxu0 %v148
    %176 = vmatprep.subr.bf16.mxu0 0
    %177 = vmatpush1.bf16.msra.mxu0 0
    %178 = vmatprep.subr.bf16.mxu0 0
    %179 = vmatpush1.bf16.msra.mxu0 0
    %180 = vmatprep.subr.bf16.mxu0 0
    %181 = vmatpush1.bf16.msra.mxu0 0
    %182 = vmatprep.subr.bf16.mxu0 0
    %183 = vmatpush1.bf16.msra.mxu0 0
    %184 = vmatprep.subr.bf16.mxu0 0
    %185 = vmatpush1.bf16.msra.mxu0 0
    %186 = vmatprep.subr.bf16.mxu0 0
    %187 = vmatpush1.bf16.msra.mxu0 0
    %188 = vmatprep.subr.bf16.mxu0 0
    %189 = vmatpush1.bf16.msra.mxu0 0
    %190 = vmatprep.subr.bf16.mxu0 0
    %191 = vmatpush1.bf16.msra.mxu0 0
    %192 = vmatprep.subr.bf16.mxu0 0
    %193 = vmatpush1.bf16.msra.mxu0 0
    %194 = vmatprep.subr.bf16.mxu0 0
    %195 = vmatpush1.bf16.msra.mxu0 0
    %196 = vmatprep.subr.bf16.mxu0 0
    %197 = vmatpush1.bf16.msra.mxu0 0
    %198 = vmatprep.subr.bf16.mxu0 0
    %199 = vmatpush1.bf16.msra.mxu0 0
    %200 = vmatprep.subr.bf16.mxu0 0
    %201 = vmatpush1.bf16.msra.mxu0 0
    %202 = vmatprep.subr.bf16.mxu0 0
    %203 = vmatpush1.bf16.msra.mxu0 0
    %204 = vmatprep.mubr.bf16.mxu0 0
    %205 = vmatmul.mubr.bf16.gmra.mrb[0].mxu0 %v170
    %v206 = vpop.f32.mrb[0].mxu0
    %v207 = vadd.f32 0.0, %v206
    %v208 = vpop.f32.mrb[0].mxu0
    %v209 = vpop.f32.mrb[0].mxu0
    %v210 = vpop.f32.mrb[0].mxu0
    %211 = vdwg.mxu0
    %213 = vset.pattern.permute.xlu0 1
    %214 = vperm.xlu0 %213, %v167
    %v215 = vpop.permute.xlu0 %214
    %v217 = vrcp.pop %v215
    %v218 = vmul.f32 %v207, %v217
    %v219 = vpack.c.bf16 %v218, %v218
    %v220 = vld [vmem:[%s0] sm:$0xff]
    %v221 = vld [vmem:[%s0 + $0x8] sm:$0xff]
    %222 = vset.pattern.permute.xlu0 2
    %223 = vperm.xlu0 %222, %v220
    %v224 = vpop.permute.xlu0 %223
    %225 = vset.pattern.permute.xlu0 2
    %226 = vperm.xlu0 %225, %v221
    %v227 = vpop.permute.xlu0 %226
    %vm228 = vcmp.eq.s32.totalorder %v224, %v36
    %vm229 = vcmp.eq.s32.totalorder %v227, %v36
    %v230 = vsel %vm228, 1.0, 0.0
    %v231 = vsel %vm229, 1.0, 0.0
    %v232 = vpack.c.bf16 %v231, %v230
    %233 = vset.pattern.permute.xlu0 3
    %234 = vperm.xlu0 %233, %v220
    %v235 = vpop.permute.xlu0 %234
    %236 = vset.pattern.permute.xlu0 3
    %237 = vperm.xlu0 %236, %v221
    %v238 = vpop.permute.xlu0 %237
    %vm239 = vcmp.eq.s32.totalorder %v235, %v36
    %vm240 = vcmp.eq.s32.totalorder %v238, %v36
    %v241 = vsel %vm239, 1.0, 0.0
    %v242 = vsel %vm240, 1.0, 0.0
    %v243 = vpack.c.bf16 %v242, %v241
    %244 = vset.pattern.permute.xlu0 4
    %245 = vperm.xlu0 %244, %v220
    %v246 = vpop.permute.xlu0 %245
    %247 = vset.pattern.permute.xlu0 4
    %248 = vperm.xlu0 %247, %v221
    %v249 = vpop.permute.xlu0 %248
    %vm250 = vcmp.eq.s32.totalorder %v246, %v36
    %vm251 = vcmp.eq.s32.totalorder %v249, %v36
    %v252 = vsel %vm250, 1.0, 0.0
    %v253 = vsel %vm251, 1.0, 0.0
    %v254 = vpack.c.bf16 %v253, %v252
    %v255 = vld [vmem:[#allocation2 + $0x1c] sm:$0xf]
    %vm256 = vcmask 56320
    %v258 = vsel %vm256, %v254, 0
    %vm260 = vcmask 1042432
    %vm261 = vcmask 1043456
    %v262 = vsel %vm260, 4294967295, 65535
    %v263 = vsel %vm261, %v262, 0
    %v265 = vand.u32 %v255, %v263
    %267 = vmatprep.subr.bf16.mxu0 0
    %268 = vmatpush1.bf16.msra.mxu0 %v265
    %269 = vmatprep.subr.bf16.mxu0 0
    %270 = vmatpush1.bf16.msra.mxu0 0
    %271 = vmatprep.subr.bf16.mxu0 0
    %272 = vmatpush1.bf16.msra.mxu0 0
    %273 = vmatprep.subr.bf16.mxu0 0
    %274 = vmatpush1.bf16.msra.mxu0 0
    %275 = vmatprep.subr.bf16.mxu0 0
    %276 = vmatpush1.bf16.msra.mxu0 0
    %277 = vmatprep.subr.bf16.mxu0 0
    %278 = vmatpush1.bf16.msra.mxu0 0
    %279 = vmatprep.subr.bf16.mxu0 0
    %280 = vmatpush1.bf16.msra.mxu0 0
    %281 = vmatprep.subr.bf16.mxu0 0
    %282 = vmatpush1.bf16.msra.mxu0 0
    %283 = vmatprep.subr.bf16.mxu0 0
    %284 = vmatpush1.bf16.msra.mxu0 0
    %285 = vmatprep.subr.bf16.mxu0 0
    %286 = vmatpush1.bf16.msra.mxu0 0
    %287 = vmatprep.subr.bf16.mxu0 0
    %288 = vmatpush1.bf16.msra.mxu0 0
    %289 = vmatprep.subr.bf16.mxu0 0
    %290 = vmatpush1.bf16.msra.mxu0 0
    %291 = vmatprep.subr.bf16.mxu0 0
    %292 = vmatpush1.bf16.msra.mxu0 0
    %293 = vmatprep.subr.bf16.mxu0 0
    %294 = vmatpush1.bf16.msra.mxu0 0
    %295 = vmatprep.subr.bf16.mxu0 0
    %296 = vmatpush1.bf16.msra.mxu0 0
    %297 = vmatprep.subr.bf16.mxu0 0
    %298 = vmatpush1.bf16.msra.mxu0 0
    %299 = vmatprep.mubr.bf16.mxu0 0
    %300 = vmatmul.mubr.bf16.gmra.mrb[0].mxu0 %v258
    %v301 = vpop.f32.mrb[0].mxu0
    %v302 = vadd.f32 0.0, %v301
    %v303 = vpop.f32.mrb[0].mxu0
    %v304 = vpop.f32.mrb[0].mxu0
    %v305 = vadd.f32 0.0, %v304
    %v306 = vpop.f32.mrb[0].mxu0
    %307 = vdwg.mxu0
    %v308 = vpack.c.bf16 %v305, %v302
    %vm309 = vcmask 64512
    %v311 = vsel %vm309, %v232, 0
    %v314 = vsel %vm261, %v219, 0
    %316 = vmatprep.subr.bf16.mxu0 0
    %317 = vmatpush1.bf16.msra.mxu0 %v314
    %318 = vmatprep.subr.bf16.mxu0 0
    %319 = vmatpush1.bf16.msra.mxu0 0
    %320 = vmatprep.subr.bf16.mxu0 0
    %321 = vmatpush1.bf16.msra.mxu0 0
    %322 = vmatprep.subr.bf16.mxu0 0
    %323 = vmatpush1.bf16.msra.mxu0 0
    %324 = vmatprep.subr.bf16.mxu0 0
    %325 = vmatpush1.bf16.msra.mxu0 0
    %326 = vmatprep.subr.bf16.mxu0 0
    %327 = vmatpush1.bf16.msra.mxu0 0
    %328 = vmatprep.subr.bf16.mxu0 0
    %329 = vmatpush1.bf16.msra.mxu0 0
    %330 = vmatprep.subr.bf16.mxu0 0
    %331 = vmatpush1.bf16.msra.mxu0 0
    %332 = vmatprep.subr.bf16.mxu0 0
    %333 = vmatpush1.bf16.msra.mxu0 0
    %334 = vmatprep.subr.bf16.mxu0 0
    %335 = vmatpush1.bf16.msra.mxu0 0
    %336 = vmatprep.subr.bf16.mxu0 0
    %337 = vmatpush1.bf16.msra.mxu0 0
    %338 = vmatprep.subr.bf16.mxu0 0
    %339 = vmatpush1.bf16.msra.mxu0 0
    %340 = vmatprep.subr.bf16.mxu0 0
    %341 = vmatpush1.bf16.msra.mxu0 0
    %342 = vmatprep.subr.bf16.mxu0 0
    %343 = vmatpush1.bf16.msra.mxu0 0
    %344 = vmatprep.subr.bf16.mxu0 0
    %345 = vmatpush1.bf16.msra.mxu0 0
    %346 = vmatprep.subr.bf16.mxu0 0
    %347 = vmatpush1.bf16.msra.mxu0 0
    %348 = vmatprep.mubr.bf16.mxu0 0
    %349 = vmatmul.mubr.bf16.gmra.mrb[0].mxu0 %v311
    %v350 = vpop.f32.mrb[0].mxu0
    %v351 = vadd.f32 0.0, %v350
    %v352 = vpop.f32.mrb[0].mxu0
    %v353 = vpop.f32.mrb[0].mxu0
    %v354 = vadd.f32 0.0, %v353
    %v355 = vpop.f32.mrb[0].mxu0
    %356 = vdwg.mxu0
    %v357 = vpack.c.bf16 %v354, %v351
    %v359 = vsel %vm309, %v243, 0
    %361 = vmatprep.subr.bf16.mxu0 0
    %362 = vmatpush1.bf16.msra.mxu0 %v314
    %363 = vmatprep.subr.bf16.mxu0 0
    %364 = vmatpush1.bf16.msra.mxu0 0
    %365 = vmatprep.subr.bf16.mxu0 0
    %366 = vmatpush1.bf16.msra.mxu0 0
    %367 = vmatprep.subr.bf16.mxu0 0
    %368 = vmatpush1.bf16.msra.mxu0 0
    %369 = vmatprep.subr.bf16.mxu0 0
    %370 = vmatpush1.bf16.msra.mxu0 0
    %371 = vmatprep.subr.bf16.mxu0 0
    %372 = vmatpush1.bf16.msra.mxu0 0
    %373 = vmatprep.subr.bf16.mxu0 0
    %374 = vmatpush1.bf16.msra.mxu0 0
    %375 = vmatprep.subr.bf16.mxu0 0
    %376 = vmatpush1.bf16.msra.mxu0 0
    %377 = vmatprep.subr.bf16.mxu0 0
    %378 = vmatpush1.bf16.msra.mxu0 0
    %379 = vmatprep.subr.bf16.mxu0 0
    %380 = vmatpush1.bf16.msra.mxu0 0
    %381 = vmatprep.subr.bf16.mxu0 0
    %382 = vmatpush1.bf16.msra.mxu0 0
    %383 = vmatprep.subr.bf16.mxu0 0
    %384 = vmatpush1.bf16.msra.mxu0 0
    %385 = vmatprep.subr.bf16.mxu0 0
    %386 = vmatpush1.bf16.msra.mxu0 0
    %387 = vmatprep.subr.bf16.mxu0 0
    %388 = vmatpush1.bf16.msra.mxu0 0
    %389 = vmatprep.subr.bf16.mxu0 0
    %390 = vmatpush1.bf16.msra.mxu0 0
    %391 = vmatprep.subr.bf16.mxu0 0
    %392 = vmatpush1.bf16.msra.mxu0 0
    %393 = vmatprep.mubr.bf16.mxu0 0
    %394 = vmatmul.mubr.bf16.gmra.mrb[0].mxu0 %v359
    %v395 = vpop.f32.mrb[0].mxu0
    %v396 = vadd.f32 0.0, %v395
    %v397 = vpop.f32.mrb[0].mxu0
    %v398 = vpop.f32.mrb[0].mxu0
    %v399 = vadd.f32 0.0, %v398
    %v400 = vpop.f32.mrb[0].mxu0
    %401 = vdwg.mxu0
    %v402 = vpack.c.bf16 %v399, %v396
    %v403 = vld [vmem:[#allocation2 + $0x20] sm:$0xf]
    %v404 = vld [vmem:[#allocation2 + $0x24] sm:$0xf]
    %v405 = vld [vmem:[#allocation2 + $0x28] sm:$0xf]
    %v406 = vld [vmem:[#allocation2 + $0x2c] sm:$0xf]
    %v407 = vld [vmem:[#allocation2 + $0x30] sm:$0xf]
    %v408 = vld [vmem:[#allocation2 + $0x34] sm:$0xf]
    %v409 = vld [vmem:[#allocation2 + $0x38] sm:$0xf]
    %v410 = vld [vmem:[#allocation2 + $0x3c] sm:$0xf]
    %v415 = vunpack.c.l.b16 %v407
    %v416 = vunpack.c.l.b16 %v408
    %v417 = vunpack.c.l.b16 %v409
    %v418 = vunpack.c.l.b16 %v410
    %v419 = vpack.c.b16 %v416, %v415
    %v420 = vpack.c.b16 %v418, %v417
    %v424 = vsel %vm168, %v402, 0
    %426 = vmatprep.subr.bf16.mxu0 0
    %427 = vmatpush1.bf16.msra.mxu0 %v419
    %428 = vmatprep.subr.bf16.mxu0 0
    %429 = vmatpush1.bf16.msra.mxu0 %v420
    %430 = vmatprep.subr.bf16.mxu0 0
    %431 = vmatpush1.bf16.msra.mxu0 0
    %432 = vmatprep.subr.bf16.mxu0 0
    %433 = vmatpush1.bf16.msra.mxu0 0
    %434 = vmatprep.subr.bf16.mxu0 0
    %435 = vmatpush1.bf16.msra.mxu0 0
    %436 = vmatprep.subr.bf16.mxu0 0
    %437 = vmatpush1.bf16.msra.mxu0 0
    %438 = vmatprep.subr.bf16.mxu0 0
    %439 = vmatpush1.bf16.msra.mxu0 0
    %440 = vmatprep.subr.bf16.mxu0 0
    %441 = vmatpush1.bf16.msra.mxu0 0
    %442 = vmatprep.subr.bf16.mxu0 0
    %443 = vmatpush1.bf16.msra.mxu0 0
    %444 = vmatprep.subr.bf16.mxu0 0
    %445 = vmatpush1.bf16.msra.mxu0 0
    %446 = vmatprep.subr.bf16.mxu0 0
    %447 = vmatpush1.bf16.msra.mxu0 0
    %448 = vmatprep.subr.bf16.mxu0 0
    %449 = vmatpush1.bf16.msra.mxu0 0
    %450 = vmatprep.subr.bf16.mxu0 0
    %451 = vmatpush1.bf16.msra.mxu0 0
    %452 = vmatprep.subr.bf16.mxu0 0
    %453 = vmatpush1.bf16.msra.mxu0 0
    %454 = vmatprep.subr.bf16.mxu0 0
    %455 = vmatpush1.bf16.msra.mxu0 0
    %456 = vmatprep.subr.bf16.mxu0 0
    %457 = vmatpush1.bf16.msra.mxu0 0
    %458 = vmatprep.mubr.bf16.mxu0 0
    %459 = vmatmul.mubr.bf16.gmra.mrb[0].mxu0 %v424
    %v460 = vpop.f32.mrb[0].mxu0
    %v461 = vadd.f32 0.0, %v460
    %v462 = vpop.f32.mrb[0].mxu0
    %v463 = vpop.f32.mrb[0].mxu0
    %v464 = vadd.f32 0.0, %v463
    %v465 = vpop.f32.mrb[0].mxu0
    %466 = vdwg.mxu0
    %v471 = vunpack.c.l.b16 %v403
    %v472 = vunpack.c.l.b16 %v404
    %v473 = vunpack.c.l.b16 %v405
    %v474 = vunpack.c.l.b16 %v406
    %v475 = vpack.c.b16 %v472, %v471
    %v476 = vpack.c.b16 %v474, %v473
    %v480 = vsel %vm168, %v357, 0
    %482 = vmatprep.subr.bf16.mxu0 0
    %483 = vmatpush1.bf16.msra.mxu0 %v475
    %484 = vmatprep.subr.bf16.mxu0 0
    %485 = vmatpush1.bf16.msra.mxu0 %v476
    %486 = vmatprep.subr.bf16.mxu0 0
    %487 = vmatpush1.bf16.msra.mxu0 0
    %488 = vmatprep.subr.bf16.mxu0 0
    %489 = vmatpush1.bf16.msra.mxu0 0
    %490 = vmatprep.subr.bf16.mxu0 0
    %491 = vmatpush1.bf16.msra.mxu0 0
    %492 = vmatprep.subr.bf16.mxu0 0
    %493 = vmatpush1.bf16.msra.mxu0 0
    %494 = vmatprep.subr.bf16.mxu0 0
    %495 = vmatpush1.bf16.msra.mxu0 0
    %496 = vmatprep.subr.bf16.mxu0 0
    %497 = vmatpush1.bf16.msra.mxu0 0
    %498 = vmatprep.subr.bf16.mxu0 0
    %499 = vmatpush1.bf16.msra.mxu0 0
    %500 = vmatprep.subr.bf16.mxu0 0
    %501 = vmatpush1.bf16.msra.mxu0 0
    %502 = vmatprep.subr.bf16.mxu0 0
    %503 = vmatpush1.bf16.msra.mxu0 0
    %504 = vmatprep.subr.bf16.mxu0 0
    %505 = vmatpush1.bf16.msra.mxu0 0
    %506 = vmatprep.subr.bf16.mxu0 0
    %507 = vmatpush1.bf16.msra.mxu0 0
    %508 = vmatprep.subr.bf16.mxu0 0
    %509 = vmatpush1.bf16.msra.mxu0 0
    %510 = vmatprep.subr.bf16.mxu0 0
    %511 = vmatpush1.bf16.msra.mxu0 0
    %512 = vmatprep.subr.bf16.mxu0 0
    %513 = vmatpush1.bf16.msra.mxu0 0
    %514 = vmatprep.mubr.bf16.mxu0 0
    %515 = vmatmul.mubr.bf16.gmra.mrb[0].mxu0 %v480
    %v516 = vpop.f32.mrb[0].mxu0
    %v517 = vadd.f32 %v461, %v516
    %v518 = vpop.f32.mrb[0].mxu0
    %v519 = vpop.f32.mrb[0].mxu0
    %v520 = vadd.f32 %v464, %v519
    %v521 = vpop.f32.mrb[0].mxu0
    %522 = vdwg.mxu0
    %v523 = vld [vmem:[#allocation2 + $0x40] sm:$0xf]
    %v524 = vld [vmem:[#allocation2 + $0x44] sm:$0xf]
    %v527 = vunpack.c.l.b16 %v523
    %v528 = vunpack.c.l.b16 %v524
    %v529 = vpack.c.b16 %v528, %v527
    %vm531 = vcmask 130048
    %v533 = vsel %vm531, %v308, 0
    %535 = vmatprep.subr.bf16.mxu0 0
    %536 = vmatpush1.bf16.msra.mxu0 %v529
    %537 = vmatprep.subr.bf16.mxu0 0
    %538 = vmatpush1.bf16.msra.mxu0 0
    %539 = vmatprep.subr.bf16.mxu0 0
    %540 = vmatpush1.bf16.msra.mxu0 0
    %541 = vmatprep.subr.bf16.mxu0 0
    %542 = vmatpush1.bf16.msra.mxu0 0
    %543 = vmatprep.subr.bf16.mxu0 0
    %544 = vmatpush1.bf16.msra.mxu0 0
    %545 = vmatprep.subr.bf16.mxu0 0
    %546 = vmatpush1.bf16.msra.mxu0 0
    %547 = vmatprep.subr.bf16.mxu0 0
    %548 = vmatpush1.bf16.msra.mxu0 0
    %549 = vmatprep.subr.bf16.mxu0 0
    %550 = vmatpush1.bf16.msra.mxu0 0
    %551 = vmatprep.subr.bf16.mxu0 0
    %552 = vmatpush1.bf16.msra.mxu0 0
    %553 = vmatprep.subr.bf16.mxu0 0
    %554 = vmatpush1.bf16.msra.mxu0 0
    %555 = vmatprep.subr.bf16.mxu0 0
    %556 = vmatpush1.bf16.msra.mxu0 0
    %557 = vmatprep.subr.bf16.mxu0 0
    %558 = vmatpush1.bf16.msra.mxu0 0
    %559 = vmatprep.subr.bf16.mxu0 0
    %560 = vmatpush1.bf16.msra.mxu0 0
    %561 = vmatprep.subr.bf16.mxu0 0
    %562 = vmatpush1.bf16.msra.mxu0 0
    %563 = vmatprep.subr.bf16.mxu0 0
    %564 = vmatpush1.bf16.msra.mxu0 0
    %565 = vmatprep.subr.bf16.mxu0 0
    %566 = vmatpush1.bf16.msra.mxu0 0
    %567 = vmatprep.mubr.bf16.mxu0 0
    %568 = vmatmul.mubr.bf16.gmra.mrb[0].mxu0 %v533
    %v569 = vpop.f32.mrb[0].mxu0
    %v570 = vadd.f32 0.0, %v569
    %v571 = vpop.f32.mrb[0].mxu0
    %v572 = vpop.f32.mrb[0].mxu0
    %v573 = vadd.f32 0.0, %v572
    %v574 = vpop.f32.mrb[0].mxu0
    %575 = vdwg.mxu0
    %v576 = vadd.f32 %v517, %v570
    %v577 = vadd.f32 %v520, %v573
    %v578 = vld [vmem:[#allocation2 + $0x48] sm:$0x1]
    %v579 = vunpack.c.l.bf16 %v578
    %v580 = vlaneseq
    %v581 = vshrl.u32 %v580, 7
    %v582 = vsub.s32 0, %v581
    %v583 = vrot.slane %v579, %v582
    %v584 = vadd.f32 %v576, %v583
    %v585 = vadd.f32 %v577, %v583
    %v586 = vld [vmem:[#allocation2 + $0x4c] sm:$0xf]
    %v587 = vld [vmem:[#allocation2 + $0x50] sm:$0xf]
    %v588 = vld [vmem:[#allocation2 + $0x54] sm:$0xf]
    %v589 = vld [vmem:[#allocation2 + $0x58] sm:$0xf]
    %v590 = vld [vmem:[#allocation2 + $0x5c] sm:$0x1]
    %v591 = vunpack.c.l.bf16 %v590
    %v592 = vlaneseq
    %v593 = vshrl.u32 %v592, 7
    %v594 = vsub.s32 0, %v593
    %v595 = vrot.slane %v591, %v594
    %v600 = vunpack.c.l.b16 %v586
    %v601 = vunpack.c.l.b16 %v587
    %v602 = vunpack.c.l.b16 %v588
    %v603 = vunpack.c.l.b16 %v589
    %v604 = vpack.c.b16 %v601, %v600
    %v605 = vpack.c.b16 %v603, %v602
    %v608 = vsel %vm168, %v219, 0
    %610 = vmatprep.subr.bf16.mxu0 0
    %611 = vmatpush1.bf16.msra.mxu0 %v604
    %612 = vmatprep.subr.bf16.mxu0 0
    %613 = vmatpush1.bf16.msra.mxu0 %v605
    %614 = vmatprep.subr.bf16.mxu0 0
    %615 = vmatpush1.bf16.msra.mxu0 0
    %616 = vmatprep.subr.bf16.mxu0 0
    %617 = vmatpush1.bf16.msra.mxu0 0
    %618 = vmatprep.subr.bf16.mxu0 0
    %619 = vmatpush1.bf16.msra.mxu0 0
    %620 = vmatprep.subr.bf16.mxu0 0
    %621 = vmatpush1.bf16.msra.mxu0 0
    %622 = vmatprep.subr.bf16.mxu0 0
    %623 = vmatpush1.bf16.msra.mxu0 0
    %624 = vmatprep.subr.bf16.mxu0 0
    %625 = vmatpush1.bf16.msra.mxu0 0
    %626 = vmatprep.subr.bf16.mxu0 0
    %627 = vmatpush1.bf16.msra.mxu0 0
    %628 = vmatprep.subr.bf16.mxu0 0
    %629 = vmatpush1.bf16.msra.mxu0 0
    %630 = vmatprep.subr.bf16.mxu0 0
    %631 = vmatpush1.bf16.msra.mxu0 0
    %632 = vmatprep.subr.bf16.mxu0 0
    %633 = vmatpush1.bf16.msra.mxu0 0
    %634 = vmatprep.subr.bf16.mxu0 0
    %635 = vmatpush1.bf16.msra.mxu0 0
    %636 = vmatprep.subr.bf16.mxu0 0
    %637 = vmatpush1.bf16.msra.mxu0 0
    %638 = vmatprep.subr.bf16.mxu0 0
    %639 = vmatpush1.bf16.msra.mxu0 0
    %640 = vmatprep.subr.bf16.mxu0 0
    %641 = vmatpush1.bf16.msra.mxu0 0
    %642 = vmatprep.mubr.bf16.mxu0 0
    %643 = vmatmul.mubr.bf16.gmra.mrb[0].mxu0 %v608
    %v644 = vpop.f32.mrb[0].mxu0
    %v645 = vadd.f32 %v595, %v644
    %v646 = vpop.f32.mrb[0].mxu0
    %v647 = vpop.f32.mrb[0].mxu0
    %v648 = vpop.f32.mrb[0].mxu0
    %649 = vdwg.mxu0
    %v650 = vld [vmem:[#allocation2 + $0x60] sm:$0xf]
    %v651 = vld [vmem:[#allocation2 + $0x64] sm:$0xf]
    %v652 = vld [vmem:[#allocation2 + $0x68] sm:$0xf]
    %v653 = vld [vmem:[#allocation2 + $0x6c] sm:$0xf]
    %v654 = vld [vmem:[#allocation2 + $0x70] sm:$0x1]
    %v655 = vunpack.c.l.bf16 %v654
    %v656 = vlaneseq
    %v657 = vshrl.u32 %v656, 7
    %v658 = vsub.s32 0, %v657
    %v659 = vrot.slane %v655, %v658
    %v664 = vunpack.c.l.b16 %v650
    %v665 = vunpack.c.l.b16 %v651
    %v666 = vunpack.c.l.b16 %v652
    %v667 = vunpack.c.l.b16 %v653
    %v668 = vpack.c.b16 %v665, %v664
    %v669 = vpack.c.b16 %v667, %v666
    %672 = vmatprep.subr.bf16.mxu0 0
    %673 = vmatpush1.bf16.msra.mxu0 %v668
    %674 = vmatprep.subr.bf16.mxu0 0
    %675 = vmatpush1.bf16.msra.mxu0 %v669
    %676 = vmatprep.subr.bf16.mxu0 0
    %677 = vmatpush1.bf16.msra.mxu0 0
    %678 = vmatprep.subr.bf16.mxu0 0
    %679 = vmatpush1.bf16.msra.mxu0 0
    %680 = vmatprep.subr.bf16.mxu0 0
    %681 = vmatpush1.bf16.msra.mxu0 0
    %682 = vmatprep.subr.bf16.mxu0 0
    %683 = vmatpush1.bf16.msra.mxu0 0
    %684 = vmatprep.subr.bf16.mxu0 0
    %685 = vmatpush1.bf16.msra.mxu0 0
    %686 = vmatprep.subr.bf16.mxu0 0
    %687 = vmatpush1.bf16.msra.mxu0 0
    %688 = vmatprep.subr.bf16.mxu0 0
    %689 = vmatpush1.bf16.msra.mxu0 0
    %690 = vmatprep.subr.bf16.mxu0 0
    %691 = vmatpush1.bf16.msra.mxu0 0
    %692 = vmatprep.subr.bf16.mxu0 0
    %693 = vmatpush1.bf16.msra.mxu0 0
    %694 = vmatprep.subr.bf16.mxu0 0
    %695 = vmatpush1.bf16.msra.mxu0 0
    %696 = vmatprep.subr.bf16.mxu0 0
    %697 = vmatpush1.bf16.msra.mxu0 0
    %698 = vmatprep.subr.bf16.mxu0 0
    %699 = vmatpush1.bf16.msra.mxu0 0
    %700 = vmatprep.subr.bf16.mxu0 0
    %701 = vmatpush1.bf16.msra.mxu0 0
    %702 = vmatprep.subr.bf16.mxu0 0
    %703 = vmatpush1.bf16.msra.mxu0 0
    %704 = vmatprep.mubr.bf16.mxu0 0
    %705 = vmatmul.mubr.bf16.gmra.mrb[0].mxu0 %v608
    %v706 = vpop.f32.mrb[0].mxu0
    %v707 = vadd.f32 %v659, %v706
    %v708 = vpop.f32.mrb[0].mxu0
    %v709 = vpop.f32.mrb[0].mxu0
    %v710 = vpop.f32.mrb[0].mxu0
    %711 = vdwg.mxu0
    %v712 = vpack.c.bf16 %v645, %v645
    %v714 = vsel %vm261, %v712, 0
    %716 = vmatprep.subr.bf16.mxu0 0
    %717 = vmatpush1.bf16.msra.mxu0 %v714
    %718 = vmatprep.subr.bf16.mxu0 0
    %719 = vmatpush1.bf16.msra.mxu0 0
    %720 = vmatprep.subr.bf16.mxu0 0
    %721 = vmatpush1.bf16.msra.mxu0 0
    %722 = vmatprep.subr.bf16.mxu0 0
    %723 = vmatpush1.bf16.msra.mxu0 0
    %724 = vmatprep.subr.bf16.mxu0 0
    %725 = vmatpush1.bf16.msra.mxu0 0
    %726 = vmatprep.subr.bf16.mxu0 0
    %727 = vmatpush1.bf16.msra.mxu0 0
    %728 = vmatprep.subr.bf16.mxu0 0
    %729 = vmatpush1.bf16.msra.mxu0 0
    %730 = vmatprep.subr.bf16.mxu0 0
    %731 = vmatpush1.bf16.msra.mxu0 0
    %732 = vmatprep.subr.bf16.mxu0 0
    %733 = vmatpush1.bf16.msra.mxu0 0
    %734 = vmatprep.subr.bf16.mxu0 0
    %735 = vmatpush1.bf16.msra.mxu0 0
    %736 = vmatprep.subr.bf16.mxu0 0
    %737 = vmatpush1.bf16.msra.mxu0 0
    %738 = vmatprep.subr.bf16.mxu0 0
    %739 = vmatpush1.bf16.msra.mxu0 0
    %740 = vmatprep.subr.bf16.mxu0 0
    %741 = vmatpush1.bf16.msra.mxu0 0
    %742 = vmatprep.subr.bf16.mxu0 0
    %743 = vmatpush1.bf16.msra.mxu0 0
    %744 = vmatprep.subr.bf16.mxu0 0
    %745 = vmatpush1.bf16.msra.mxu0 0
    %746 = vmatprep.subr.bf16.mxu0 0
    %747 = vmatpush1.bf16.msra.mxu0 0
    %748 = vmatprep.mubr.bf16.mxu0 0
    %749 = vmatmul.mubr.bf16.gmra.mrb[0].mxu0 %v311
    %v750 = vpop.f32.mrb[0].mxu0
    %v751 = vadd.f32 0.0, %v750
    %v752 = vpop.f32.mrb[0].mxu0
    %v753 = vpop.f32.mrb[0].mxu0
    %v754 = vadd.f32 0.0, %v753
    %v755 = vpop.f32.mrb[0].mxu0
    %756 = vdwg.mxu0
    %v757 = vpack.c.bf16 %v754, %v751
    %v758 = vpack.c.bf16 %v707, %v707
    %v760 = vsel %vm261, %v758, 0
    %762 = vmatprep.subr.bf16.mxu0 0
    %763 = vmatpush1.bf16.msra.mxu0 %v760
    %764 = vmatprep.subr.bf16.mxu0 0
    %765 = vmatpush1.bf16.msra.mxu0 0
    %766 = vmatprep.subr.bf16.mxu0 0
    %767 = vmatpush1.bf16.msra.mxu0 0
    %768 = vmatprep.subr.bf16.mxu0 0
    %769 = vmatpush1.bf16.msra.mxu0 0
    %770 = vmatprep.subr.bf16.mxu0 0
    %771 = vmatpush1.bf16.msra.mxu0 0
    %772 = vmatprep.subr.bf16.mxu0 0
    %773 = vmatpush1.bf16.msra.mxu0 0
    %774 = vmatprep.subr.bf16.mxu0 0
    %775 = vmatpush1.bf16.msra.mxu0 0
    %776 = vmatprep.subr.bf16.mxu0 0
    %777 = vmatpush1.bf16.msra.mxu0 0
    %778 = vmatprep.subr.bf16.mxu0 0
    %779 = vmatpush1.bf16.msra.mxu0 0
    %780 = vmatprep.subr.bf16.mxu0 0
    %781 = vmatpush1.bf16.msra.mxu0 0
    %782 = vmatprep.subr.bf16.mxu0 0
    %783 = vmatpush1.bf16.msra.mxu0 0
    %784 = vmatprep.subr.bf16.mxu0 0
    %785 = vmatpush1.bf16.msra.mxu0 0
    %786 = vmatprep.subr.bf16.mxu0 0
    %787 = vmatpush1.bf16.msra.mxu0 0
    %788 = vmatprep.subr.bf16.mxu0 0
    %789 = vmatpush1.bf16.msra.mxu0 0
    %790 = vmatprep.subr.bf16.mxu0 0
    %791 = vmatpush1.bf16.msra.mxu0 0
    %792 = vmatprep.subr.bf16.mxu0 0
    %793 = vmatpush1.bf16.msra.mxu0 0
    %794 = vmatprep.mubr.bf16.mxu0 0
    %795 = vmatmul.mubr.bf16.gmra.mrb[0].mxu0 %v359
    %v796 = vpop.f32.mrb[0].mxu0
    %v797 = vadd.f32 0.0, %v796
    %v798 = vpop.f32.mrb[0].mxu0
    %v799 = vpop.f32.mrb[0].mxu0
    %v800 = vadd.f32 0.0, %v799
    %v801 = vpop.f32.mrb[0].mxu0
    %802 = vdwg.mxu0
    %v803 = vpack.c.bf16 %v800, %v797
    %v804 = vld [vmem:[#allocation2 + $0x74] sm:$0xf]
    %v805 = vld [vmem:[#allocation2 + $0x78] sm:$0xf]
    %v806 = vld [vmem:[#allocation2 + $0x7c] sm:$0xf]
    %v807 = vld [vmem:[#allocation2 + $0x80] sm:$0xf]
    %v808 = vld [vmem:[#allocation2 + $0x84] sm:$0xf]
    %v809 = vld [vmem:[#allocation2 + $0x88] sm:$0xf]
    %v810 = vld [vmem:[#allocation2 + $0x8c] sm:$0xf]
    %v811 = vld [vmem:[#allocation2 + $0x90] sm:$0xf]
    %v816 = vunpack.c.l.b16 %v808
    %v817 = vunpack.c.l.b16 %v809
    %v818 = vunpack.c.l.b16 %v810
    %v819 = vunpack.c.l.b16 %v811
    %v820 = vpack.c.b16 %v817, %v816
    %v821 = vpack.c.b16 %v819, %v818
    %v825 = vsel %vm168, %v803, 0
    %827 = vmatprep.subr.bf16.mxu0 0
    %828 = vmatpush1.bf16.msra.mxu0 %v820
    %829 = vmatprep.subr.bf16.mxu0 0
    %830 = vmatpush1.bf16.msra.mxu0 %v821
    %831 = vmatprep.subr.bf16.mxu0 0
    %832 = vmatpush1.bf16.msra.mxu0 0
    %833 = vmatprep.subr.bf16.mxu0 0
    %834 = vmatpush1.bf16.msra.mxu0 0
    %835 = vmatprep.subr.bf16.mxu0 0
    %836 = vmatpush1.bf16.msra.mxu0 0
    %837 = vmatprep.subr.bf16.mxu0 0
    %838 = vmatpush1.bf16.msra.mxu0 0
    %839 = vmatprep.subr.bf16.mxu0 0
    %840 = vmatpush1.bf16.msra.mxu0 0
    %841 = vmatprep.subr.bf16.mxu0 0
    %842 = vmatpush1.bf16.msra.mxu0 0
    %843 = vmatprep.subr.bf16.mxu0 0
    %844 = vmatpush1.bf16.msra.mxu0 0
    %845 = vmatprep.subr.bf16.mxu0 0
    %846 = vmatpush1.bf16.msra.mxu0 0
    %847 = vmatprep.subr.bf16.mxu0 0
    %848 = vmatpush1.bf16.msra.mxu0 0
    %849 = vmatprep.subr.bf16.mxu0 0
    %850 = vmatpush1.bf16.msra.mxu0 0
    %851 = vmatprep.subr.bf16.mxu0 0
    %852 = vmatpush1.bf16.msra.mxu0 0
    %853 = vmatprep.subr.bf16.mxu0 0
    %854 = vmatpush1.bf16.msra.mxu0 0
    %855 = vmatprep.subr.bf16.mxu0 0
    %856 = vmatpush1.bf16.msra.mxu0 0
    %857 = vmatprep.subr.bf16.mxu0 0
    %858 = vmatpush1.bf16.msra.mxu0 0
    %859 = vmatprep.mubr.bf16.mxu0 0
    %860 = vmatmul.mubr.bf16.gmra.mrb[0].mxu0 %v825
    %v861 = vpop.f32.mrb[0].mxu0
    %v862 = vadd.f32 0.0, %v861
    %v863 = vpop.f32.mrb[0].mxu0
    %v864 = vpop.f32.mrb[0].mxu0
    %v865 = vadd.f32 0.0, %v864
    %v866 = vpop.f32.mrb[0].mxu0
    %867 = vdwg.mxu0
    %v872 = vunpack.c.l.b16 %v804
    %v873 = vunpack.c.l.b16 %v805
    %v874 = vunpack.c.l.b16 %v806
    %v875 = vunpack.c.l.b16 %v807
    %v876 = vpack.c.b16 %v873, %v872
    %v877 = vpack.c.b16 %v875, %v874
    %v881 = vsel %vm168, %v757, 0
    %883 = vmatprep.subr.bf16.mxu0 0
    %884 = vmatpush1.bf16.msra.mxu0 %v876
    %885 = vmatprep.subr.bf16.mxu0 0
    %886 = vmatpush1.bf16.msra.mxu0 %v877
    %887 = vmatprep.subr.bf16.mxu0 0
    %888 = vmatpush1.bf16.msra.mxu0 0
    %889 = vmatprep.subr.bf16.mxu0 0
    %890 = vmatpush1.bf16.msra.mxu0 0
    %891 = vmatprep.subr.bf16.mxu0 0
    %892 = vmatpush1.bf16.msra.mxu0 0
    %893 = vmatprep.subr.bf16.mxu0 0
    %894 = vmatpush1.bf16.msra.mxu0 0
    %895 = vmatprep.subr.bf16.mxu0 0
    %896 = vmatpush1.bf16.msra.mxu0 0
    %897 = vmatprep.subr.bf16.mxu0 0
    %898 = vmatpush1.bf16.msra.mxu0 0
    %899 = vmatprep.subr.bf16.mxu0 0
    %900 = vmatpush1.bf16.msra.mxu0 0
    %901 = vmatprep.subr.bf16.mxu0 0
    %902 = vmatpush1.bf16.msra.mxu0 0
    %903 = vmatprep.subr.bf16.mxu0 0
    %904 = vmatpush1.bf16.msra.mxu0 0
    %905 = vmatprep.subr.bf16.mxu0 0
    %906 = vmatpush1.bf16.msra.mxu0 0
    %907 = vmatprep.subr.bf16.mxu0 0
    %908 = vmatpush1.bf16.msra.mxu0 0
    %909 = vmatprep.subr.bf16.mxu0 0
    %910 = vmatpush1.bf16.msra.mxu0 0
    %911 = vmatprep.subr.bf16.mxu0 0
    %912 = vmatpush1.bf16.msra.mxu0 0
    %913 = vmatprep.subr.bf16.mxu0 0
    %914 = vmatpush1.bf16.msra.mxu0 0
    %915 = vmatprep.mubr.bf16.mxu0 0
    %916 = vmatmul.mubr.bf16.gmra.mrb[0].mxu0 %v881
    %v917 = vpop.f32.mrb[0].mxu0
    %v918 = vadd.f32 %v862, %v917
    %v919 = vpop.f32.mrb[0].mxu0
    %v920 = vpop.f32.mrb[0].mxu0
    %v921 = vadd.f32 %v865, %v920
    %v922 = vpop.f32.mrb[0].mxu0
    %923 = vdwg.mxu0
    %v924 = vld [vmem:[#allocation2 + $0x94] sm:$0xf]
    %v925 = vld [vmem:[#allocation2 + $0x98] sm:$0xf]
    %v928 = vunpack.c.l.b16 %v924
    %v929 = vunpack.c.l.b16 %v925
    %v930 = vpack.c.b16 %v929, %v928
    %932 = vmatprep.subr.bf16.mxu0 0
    %933 = vmatpush1.bf16.msra.mxu0 %v930
    %934 = vmatprep.subr.bf16.mxu0 0
    %935 = vmatpush1.bf16.msra.mxu0 0
    %936 = vmatprep.subr.bf16.mxu0 0
    %937 = vmatpush1.bf16.msra.mxu0 0
    %938 = vmatprep.subr.bf16.mxu0 0
    %939 = vmatpush1.bf16.msra.mxu0 0
    %940 = vmatprep.subr.bf16.mxu0 0
    %941 = vmatpush1.bf16.msra.mxu0 0
    %942 = vmatprep.subr.bf16.mxu0 0
    %943 = vmatpush1.bf16.msra.mxu0 0
    %944 = vmatprep.subr.bf16.mxu0 0
    %945 = vmatpush1.bf16.msra.mxu0 0
    %946 = vmatprep.subr.bf16.mxu0 0
    %947 = vmatpush1.bf16.msra.mxu0 0
    %948 = vmatprep.subr.bf16.mxu0 0
    %949 = vmatpush1.bf16.msra.mxu0 0
    %950 = vmatprep.subr.bf16.mxu0 0
    %951 = vmatpush1.bf16.msra.mxu0 0
    %952 = vmatprep.subr.bf16.mxu0 0
    %953 = vmatpush1.bf16.msra.mxu0 0
    %954 = vmatprep.subr.bf16.mxu0 0
    %955 = vmatpush1.bf16.msra.mxu0 0
    %956 = vmatprep.subr.bf16.mxu0 0
    %957 = vmatpush1.bf16.msra.mxu0 0
    %958 = vmatprep.subr.bf16.mxu0 0
    %959 = vmatpush1.bf16.msra.mxu0 0
    %960 = vmatprep.subr.bf16.mxu0 0
    %961 = vmatpush1.bf16.msra.mxu0 0
    %962 = vmatprep.subr.bf16.mxu0 0
    %963 = vmatpush1.bf16.msra.mxu0 0
    %964 = vmatprep.mubr.bf16.mxu0 0
    %965 = vmatmul.mubr.bf16.gmra.mrb[0].mxu0 %v533
    %v966 = vpop.f32.mrb[0].mxu0
    %v967 = vadd.f32 0.0, %v966
    %v968 = vpop.f32.mrb[0].mxu0
    %v969 = vpop.f32.mrb[0].mxu0
    %v970 = vadd.f32 0.0, %v969
    %v971 = vpop.f32.mrb[0].mxu0
    %972 = vdwg.mxu0
    %v973 = vadd.f32 %v918, %v967
    %v974 = vadd.f32 %v921, %v970
    %v975 = vld [vmem:[#allocation2 + $0x9c] sm:$0x1]
    %v976 = vunpack.c.l.bf16 %v975
    %v977 = vlaneseq
    %v978 = vshrl.u32 %v977, 7
    %v979 = vsub.s32 0, %v978
    %v980 = vrot.slane %v976, %v979
    %v981 = vadd.f32 %v973, %v980
    %v982 = vadd.f32 %v974, %v980
    %v983 = vpack.c.bf16 %v982, %v981
    %v984 = vld [vmem:[#allocation2 + $0xa0] sm:$0xf]
    %v985 = vld [vmem:[#allocation2 + $0xa4] sm:$0xf]
    %v986 = vld [vmem:[#allocation2 + $0xa8] sm:$0xf]
    %v987 = vld [vmem:[#allocation2 + $0xac] sm:$0xf]
    %v988 = vld [vmem:[#allocation2 + $0xb0] sm:$0xf]
    %v989 = vld [vmem:[#allocation2 + $0xb4] sm:$0xf]
    %v990 = vld [vmem:[#allocation2 + $0xb8] sm:$0xf]
    %v991 = vld [vmem:[#allocation2 + $0xbc] sm:$0xf]
    %v992 = vld [vmem:[#allocation2 + $0xc0] sm:$0x1]
    %v993 = vunpack.c.l.bf16 %v992
    %v994 = vlaneseq
    %v995 = vshrl.u32 %v994, 7
    %v996 = vsub.s32 0, %v995
    %v997 = vrot.slane %v993, %v996
    %v1006 = vunpack.c.l.b16 %v984
    %v1007 = vunpack.c.l.b16 %v985
    %v1008 = vunpack.c.l.b16 %v986
    %v1009 = vunpack.c.l.b16 %v987
    %v1010 = vunpack.c.l.b16 %v988
    %v1011 = vunpack.c.l.b16 %v989
    %v1012 = vunpack.c.l.b16 %v990
    %v1013 = vunpack.c.l.b16 %v991
    %v1014 = vpack.c.b16 %v1007, %v1006
    %v1015 = vpack.c.b16 %v1009, %v1008
    %v1016 = vpack.c.b16 %v1011, %v1010
    %v1017 = vpack.c.b16 %v1013, %v1012
    %vm1022 = vcmask 523264
    %v1024 = vsel %vm1022, %v983, 0
    %1026 = vmatprep.subr.bf16.mxu0 0
    %1027 = vmatpush1.bf16.msra.mxu0 %v1014
    %1028 = vmatprep.subr.bf16.mxu0 0
    %1029 = vmatpush1.bf16.msra.mxu0 %v1015
    %1030 = vmatprep.subr.bf16.mxu0 0
    %1031 = vmatpush1.bf16.msra.mxu0 %v1016
    %1032 = vmatprep.subr.bf16.mxu0 0
    %1033 = vmatpush1.bf16.msra.mxu0 %v1017
    %1034 = vmatprep.subr.bf16.mxu0 0
    %1035 = vmatpush1.bf16.msra.mxu0 0
    %1036 = vmatprep.subr.bf16.mxu0 0
    %1037 = vmatpush1.bf16.msra.mxu0 0
    %1038 = vmatprep.subr.bf16.mxu0 0
    %1039 = vmatpush1.bf16.msra.mxu0 0
    %1040 = vmatprep.subr.bf16.mxu0 0
    %1041 = vmatpush1.bf16.msra.mxu0 0
    %1042 = vmatprep.subr.bf16.mxu0 0
    %1043 = vmatpush1.bf16.msra.mxu0 0
    %1044 = vmatprep.subr.bf16.mxu0 0
    %1045 = vmatpush1.bf16.msra.mxu0 0
    %1046 = vmatprep.subr.bf16.mxu0 0
    %1047 = vmatpush1.bf16.msra.mxu0 0
    %1048 = vmatprep.subr.bf16.mxu0 0
    %1049 = vmatpush1.bf16.msra.mxu0 0
    %1050 = vmatprep.subr.bf16.mxu0 0
    %1051 = vmatpush1.bf16.msra.mxu0 0
    %1052 = vmatprep.subr.bf16.mxu0 0
    %1053 = vmatpush1.bf16.msra.mxu0 0
    %1054 = vmatprep.subr.bf16.mxu0 0
    %1055 = vmatpush1.bf16.msra.mxu0 0
    %1056 = vmatprep.subr.bf16.mxu0 0
    %1057 = vmatpush1.bf16.msra.mxu0 0
    %1058 = vmatprep.mubr.bf16.mxu0 0
    %1059 = vmatmul.mubr.bf16.gmra.mrb[0].mxu0 %v1024
    %v1060 = vpop.f32.mrb[0].mxu0
    %v1061 = vadd.f32 %v997, %v1060
    %v1062 = vpop.f32.mrb[0].mxu0
    %v1063 = vpop.f32.mrb[0].mxu0
    %v1064 = vadd.f32 %v997, %v1063
    %v1065 = vpop.f32.mrb[0].mxu0
    %1066 = vdwg.mxu0
    %v1067 = vmax.f32 %v1061, 0.0
    %v1068 = vmax.f32 %v1064, 0.0
    %v1069 = vpack.c.bf16 %v1068, %v1067
    %v1070 = vld [vmem:[#allocation2 + $0xc4] sm:$0xf]
    %v1071 = vld [vmem:[#allocation2 + $0xc8] sm:$0xf]
    %v1072 = vld [vmem:[#allocation2 + $0xcc] sm:$0xf]
    %v1073 = vld [vmem:[#allocation2 + $0xd0] sm:$0xf]
    %v1074 = vpack.c.bf16 %v585, %v584
    %v1075 = vld [vmem:[#allocation2 + $0xd4] sm:$0xf]
    %v1076 = vld [vmem:[#allocation2 + $0xd8] sm:$0xf]
    %v1077 = vld [vmem:[#allocation2 + $0xdc] sm:$0xf]
    %v1078 = vld [vmem:[#allocation2 + $0xe0] sm:$0xf]
    %v1083 = vunpack.c.l.b16 %v1075
    %v1084 = vunpack.c.l.b16 %v1076
    %v1085 = vunpack.c.l.b16 %v1077
    %v1086 = vunpack.c.l.b16 %v1078
    %v1087 = vpack.c.b16 %v1084, %v1083
    %v1088 = vpack.c.b16 %v1086, %v1085
    %v1092 = vsel %vm168, %v1074, 0
    %1094 = vmatprep.subr.bf16.mxu0 0
    %1095 = vmatpush1.bf16.msra.mxu0 %v1087
    %1096 = vmatprep.subr.bf16.mxu0 0
    %1097 = vmatpush1.bf16.msra.mxu0 %v1088
    %1098 = vmatprep.subr.bf16.mxu0 0
    %1099 = vmatpush1.bf16.msra.mxu0 0
    %1100 = vmatprep.subr.bf16.mxu0 0
    %1101 = vmatpush1.bf16.msra.mxu0 0
    %1102 = vmatprep.subr.bf16.mxu0 0
    %1103 = vmatpush1.bf16.msra.mxu0 0
    %1104 = vmatprep.subr.bf16.mxu0 0
    %1105 = vmatpush1.bf16.msra.mxu0 0
    %1106 = vmatprep.subr.bf16.mxu0 0
    %1107 = vmatpush1.bf16.msra.mxu0 0
    %1108 = vmatprep.subr.bf16.mxu0 0
    %1109 = vmatpush1.bf16.msra.mxu0 0
    %1110 = vmatprep.subr.bf16.mxu0 0
    %1111 = vmatpush1.bf16.msra.mxu0 0
    %1112 = vmatprep.subr.bf16.mxu0 0
    %1113 = vmatpush1.bf16.msra.mxu0 0
    %1114 = vmatprep.subr.bf16.mxu0 0
    %1115 = vmatpush1.bf16.msra.mxu0 0
    %1116 = vmatprep.subr.bf16.mxu0 0
    %1117 = vmatpush1.bf16.msra.mxu0 0
    %1118 = vmatprep.subr.bf16.mxu0 0
    %1119 = vmatpush1.bf16.msra.mxu0 0
    %1120 = vmatprep.subr.bf16.mxu0 0
    %1121 = vmatpush1.bf16.msra.mxu0 0
    %1122 = vmatprep.subr.bf16.mxu0 0
    %1123 = vmatpush1.bf16.msra.mxu0 0
    %1124 = vmatprep.subr.bf16.mxu0 0
    %1125 = vmatpush1.bf16.msra.mxu0 0
    %1126 = vmatprep.mubr.bf16.mxu0 0
    %1127 = vmatmul.mubr.bf16.gmra.mrb[0].mxu0 %v1092
    %v1128 = vpop.f32.mrb[0].mxu0
    %v1129 = vadd.f32 0.0, %v1128
    %v1130 = vpop.f32.mrb[0].mxu0
    %v1131 = vpop.f32.mrb[0].mxu0
    %v1132 = vadd.f32 0.0, %v1131
    %v1133 = vpop.f32.mrb[0].mxu0
    %1134 = vdwg.mxu0
    %v1139 = vunpack.c.l.b16 %v1070
    %v1140 = vunpack.c.l.b16 %v1071
    %v1141 = vunpack.c.l.b16 %v1072
    %v1142 = vunpack.c.l.b16 %v1073
    %v1143 = vpack.c.b16 %v1140, %v1139
    %v1144 = vpack.c.b16 %v1142, %v1141
    %v1148 = vsel %vm168, %v1069, 0
    %1150 = vmatprep.subr.bf16.mxu0 0
    %1151 = vmatpush1.bf16.msra.mxu0 %v1143
    %1152 = vmatprep.subr.bf16.mxu0 0
    %1153 = vmatpush1.bf16.msra.mxu0 %v1144
    %1154 = vmatprep.subr.bf16.mxu0 0
    %1155 = vmatpush1.bf16.msra.mxu0 0
    %1156 = vmatprep.subr.bf16.mxu0 0
    %1157 = vmatpush1.bf16.msra.mxu0 0
    %1158 = vmatprep.subr.bf16.mxu0 0
    %1159 = vmatpush1.bf16.msra.mxu0 0
    %1160 = vmatprep.subr.bf16.mxu0 0
    %1161 = vmatpush1.bf16.msra.mxu0 0
    %1162 = vmatprep.subr.bf16.mxu0 0
    %1163 = vmatpush1.bf16.msra.mxu0 0
    %1164 = vmatprep.subr.bf16.mxu0 0
    %1165 = vmatpush1.bf16.msra.mxu0 0
    %1166 = vmatprep.subr.bf16.mxu0 0
    %1167 = vmatpush1.bf16.msra.mxu0 0
    %1168 = vmatprep.subr.bf16.mxu0 0
    %1169 = vmatpush1.bf16.msra.mxu0 0
    %1170 = vmatprep.subr.bf16.mxu0 0
    %1171 = vmatpush1.bf16.msra.mxu0 0
    %1172 = vmatprep.subr.bf16.mxu0 0
    %1173 = vmatpush1.bf16.msra.mxu0 0
    %1174 = vmatprep.subr.bf16.mxu0 0
    %1175 = vmatpush1.bf16.msra.mxu0 0
    %1176 = vmatprep.subr.bf16.mxu0 0
    %1177 = vmatpush1.bf16.msra.mxu0 0
    %1178 = vmatprep.subr.bf16.mxu0 0
    %1179 = vmatpush1.bf16.msra.mxu0 0
    %1180 = vmatprep.subr.bf16.mxu0 0
    %1181 = vmatpush1.bf16.msra.mxu0 0
    %1182 = vmatprep.mubr.bf16.mxu0 0
    %1183 = vmatmul.mubr.bf16.gmra.mrb[0].mxu0 %v1148
    %v1184 = vpop.f32.mrb[0].mxu0
    %v1185 = vadd.f32 %v1129, %v1184
    %v1186 = vpop.f32.mrb[0].mxu0
    %v1187 = vpop.f32.mrb[0].mxu0
    %v1188 = vadd.f32 %v1132, %v1187
    %v1189 = vpop.f32.mrb[0].mxu0
    %1190 = vdwg.mxu0
    %v1191 = vld [vmem:[#allocation2 + $0xe4] sm:$0x1]
    %v1192 = vunpack.c.l.bf16 %v1191
    %v1193 = vlaneseq
    %v1194 = vshrl.u32 %v1193, 7
    %v1195 = vsub.s32 0, %v1194
    %v1196 = vrot.slane %v1192, %v1195
    %v1197 = vadd.f32 %v1185, %v1196
    %v1198 = vadd.f32 %v1188, %v1196
    %1199 = vst [vmem:[%s3] sm:$0xff] %v1197
    %1200 = vst [vmem:[%s3 + $0x8] sm:$0xff] %v1198
    %v1201 = vld [vmem:[#allocation2 + $0xe8] sm:$0xf]
    %v1202 = vld [vmem:[#allocation2 + $0xec] sm:$0xf]
    %v1203 = vld [vmem:[#allocation2 + $0xf0] sm:$0xf]
    %v1204 = vld [vmem:[#allocation2 + $0xf4] sm:$0xf]
    %v1205 = vld [vmem:[#allocation2 + $0xf8] sm:$0xf]
    %v1206 = vld [vmem:[#allocation2 + $0xfc] sm:$0xf]
    %v1207 = vld [vmem:[#allocation2 + $0x100] sm:$0xf]
    %v1208 = vld [vmem:[#allocation2 + $0x104] sm:$0xf]
    %v1213 = vunpack.c.l.b16 %v1205
    %v1214 = vunpack.c.l.b16 %v1206
    %v1215 = vunpack.c.l.b16 %v1207
    %v1216 = vunpack.c.l.b16 %v1208
    %v1217 = vpack.c.b16 %v1214, %v1213
    %v1218 = vpack.c.b16 %v1216, %v1215
    %v1221 = vsel %vm168, %v758, 0
    %1223 = vmatprep.subr.bf16.mxu0 0
    %1224 = vmatpush1.bf16.msra.mxu0 %v1217
    %1225 = vmatprep.subr.bf16.mxu0 0
    %1226 = vmatpush1.bf16.msra.mxu0 %v1218
    %1227 = vmatprep.subr.bf16.mxu0 0
    %1228 = vmatpush1.bf16.msra.mxu0 0
    %1229 = vmatprep.subr.bf16.mxu0 0
    %1230 = vmatpush1.bf16.msra.mxu0 0
    %1231 = vmatprep.subr.bf16.mxu0 0
    %1232 = vmatpush1.bf16.msra.mxu0 0
    %1233 = vmatprep.subr.bf16.mxu0 0
    %1234 = vmatpush1.bf16.msra.mxu0 0
    %1235 = vmatprep.subr.bf16.mxu0 0
    %1236 = vmatpush1.bf16.msra.mxu0 0
    %1237 = vmatprep.subr.bf16.mxu0 0
    %1238 = vmatpush1.bf16.msra.mxu0 0
    %1239 = vmatprep.subr.bf16.mxu0 0
    %1240 = vmatpush1.bf16.msra.mxu0 0
    %1241 = vmatprep.subr.bf16.mxu0 0
    %1242 = vmatpush1.bf16.msra.mxu0 0
    %1243 = vmatprep.subr.bf16.mxu0 0
    %1244 = vmatpush1.bf16.msra.mxu0 0
    %1245 = vmatprep.subr.bf16.mxu0 0
    %1246 = vmatpush1.bf16.msra.mxu0 0
    %1247 = vmatprep.subr.bf16.mxu0 0
    %1248 = vmatpush1.bf16.msra.mxu0 0
    %1249 = vmatprep.subr.bf16.mxu0 0
    %1250 = vmatpush1.bf16.msra.mxu0 0
    %1251 = vmatprep.subr.bf16.mxu0 0
    %1252 = vmatpush1.bf16.msra.mxu0 0
    %1253 = vmatprep.subr.bf16.mxu0 0
    %1254 = vmatpush1.bf16.msra.mxu0 0
    %1255 = vmatprep.mubr.bf16.mxu0 0
    %1256 = vmatmul.mubr.bf16.gmra.mrb[0].mxu0 %v1221
    %v1257 = vpop.f32.mrb[0].mxu0
    %v1258 = vadd.f32 0.0, %v1257
    %v1259 = vpop.f32.mrb[0].mxu0
    %v1260 = vpop.f32.mrb[0].mxu0
    %v1261 = vpop.f32.mrb[0].mxu0
    %1262 = vdwg.mxu0
    %v1267 = vunpack.c.l.b16 %v1201
    %v1268 = vunpack.c.l.b16 %v1202
    %v1269 = vunpack.c.l.b16 %v1203
    %v1270 = vunpack.c.l.b16 %v1204
    %v1271 = vpack.c.b16 %v1268, %v1267
    %v1272 = vpack.c.b16 %v1270, %v1269
    %v1275 = vsel %vm168, %v712, 0
    %1277 = vmatprep.subr.bf16.mxu0 0
    %1278 = vmatpush1.bf16.msra.mxu0 %v1271
    %1279 = vmatprep.subr.bf16.mxu0 0
    %1280 = vmatpush1.bf16.msra.mxu0 %v1272
    %1281 = vmatprep.subr.bf16.mxu0 0
    %1282 = vmatpush1.bf16.msra.mxu0 0
    %1283 = vmatprep.subr.bf16.mxu0 0
    %1284 = vmatpush1.bf16.msra.mxu0 0
    %1285 = vmatprep.subr.bf16.mxu0 0
    %1286 = vmatpush1.bf16.msra.mxu0 0
    %1287 = vmatprep.subr.bf16.mxu0 0
    %1288 = vmatpush1.bf16.msra.mxu0 0
    %1289 = vmatprep.subr.bf16.mxu0 0
    %1290 = vmatpush1.bf16.msra.mxu0 0
    %1291 = vmatprep.subr.bf16.mxu0 0
    %1292 = vmatpush1.bf16.msra.mxu0 0
    %1293 = vmatprep.subr.bf16.mxu0 0
    %1294 = vmatpush1.bf16.msra.mxu0 0
    %1295 = vmatprep.subr.bf16.mxu0 0
    %1296 = vmatpush1.bf16.msra.mxu0 0
    %1297 = vmatprep.subr.bf16.mxu0 0
    %1298 = vmatpush1.bf16.msra.mxu0 0
    %1299 = vmatprep.subr.bf16.mxu0 0
    %1300 = vmatpush1.bf16.msra.mxu0 0
    %1301 = vmatprep.subr.bf16.mxu0 0
    %1302 = vmatpush1.bf16.msra.mxu0 0
    %1303 = vmatprep.subr.bf16.mxu0 0
    %1304 = vmatpush1.bf16.msra.mxu0 0
    %1305 = vmatprep.subr.bf16.mxu0 0
    %1306 = vmatpush1.bf16.msra.mxu0 0
    %1307 = vmatprep.subr.bf16.mxu0 0
    %1308 = vmatpush1.bf16.msra.mxu0 0
    %1309 = vmatprep.mubr.bf16.mxu0 0
    %1310 = vmatmul.mubr.bf16.gmra.mrb[0].mxu0 %v1275
    %v1311 = vpop.f32.mrb[0].mxu0
    %v1312 = vadd.f32 %v1258, %v1311
    %v1313 = vpop.f32.mrb[0].mxu0
    %v1314 = vpop.f32.mrb[0].mxu0
    %v1315 = vpop.f32.mrb[0].mxu0
    %1316 = vdwg.mxu0
    %v1317 = vld [vmem:[#allocation2 + $0x108] sm:$0x1]
    %v1318 = vunpack.c.l.bf16 %v1317
    %v1319 = vlaneseq
    %v1320 = vshrl.u32 %v1319, 7
    %v1321 = vsub.s32 0, %v1320
    %v1322 = vrot.slane %v1318, %v1321
    %v1323 = vadd.f32 %v1312, %v1322
    %1324 = vst [vmem:[%s4] sm:$0xff] %v1323
    // Predicated region
    $region18: #{device_fwd.1} parent=1 // pred_check
      _
    $region19: #{device_fwd.1} parent=1 // pred_check_branch
      %1326 = sbr.rel (0) target = $region21
    $region20: #{device_fwd.1} parent=1 // pred_region
      _
    $region21: #{device_fwd.1} parent=1 // pred_fallthru
      _
    // Predicated region
    $region22: #{device_fwd.1} parent=1 // pred_check
      _
    $region23: #{device_fwd.1} parent=1 // pred_check_branch
      %1328 = sbr.rel (0) target = $region25
    $region24: #{device_fwd.1} parent=1 // pred_region
      _
    $region25: #{device_fwd.1} parent=1 // pred_fallthru
      _
    // Predicated region
    $region26: #{device_fwd.1} parent=1 // pred_check
      _
    $region27: #{device_fwd.1} parent=1 // pred_check_branch
      %1330 = sbr.rel (0) target = $region29
    $region28: #{device_fwd.1} parent=1 // pred_region
      _
    $region29: #{device_fwd.1} parent=1 // pred_fallthru
      _
    // Predicated region
    $region30: #{device_fwd.1} parent=1 // pred_check
      _
    $region31: #{device_fwd.1} parent=1 // pred_check_branch
      %1332 = sbr.rel (0) target = $region33
    $region32: #{device_fwd.1} parent=1 // pred_region
      _
    $region33: #{device_fwd.1} parent=1 // pred_fallthru
      _
    %1333 = vsyncpa [#allocation3], 1

</llo_original>
